<compile_context>
chip_gen: v7x
topology: tpu7x:2x2x1
jax: 0.10.0
libtpu: 0.0.40
codegen_flags: <defaults>
</compile_context>

<pallas_src>
import numpy as np
import jax
import jax.numpy as jnp
from jax.experimental import pallas as pl
from jax.experimental.pallas import tpu as pltpu

# ----------------------------- configuration -----------------------------
F_COLS = 6                    # len(filter_cols)
HIDDEN = 8                    # hidden_dim (must equal F_COLS + 2)
N_FEAT = F_COLS + 2           # features in the attention stack (no encoder)
INT_DIM = 5
FLOAT_DIM = 4
NUM_CLASSES = 3
BATCH = 4

FEAT_W = N_FEAT * HIDDEN      # 64 : width of feature_merged
X_W = 16                      # packed input width: 6 cat + 5 int + 4 float + 1 pad
OUT_W = 128                   # lane-dense output slab width
P_ROWS = 88                   # dense packed parameter buffer rows (~45 KiB f32)
SCORE_COL0 = NUM_CLASSES + 1  # attention scores live in slab cols [4, 4+N_FEAT)

FLOPS_PER_ROW = 11520         # 2 * sum(in*out) over the 8 fused matmuls
TRANS_PER_ROW = 17            # exp(8) + tanh(8) + reciprocal(1)

assert HIDDEN == F_COLS + 2, "original module requires hidden_dim == len(filter_cols)+2"


def _round_up(v, m):
    return -(-v // m) * m


# ------------------------------- kernel ----------------------------------
def _make_kernel(approx_softmax: bool):
    def chemberta_kernel(x_ref, p_ref, out_ref):
        """x_ref: [bb, 16] packed features; p_ref: [88, 128] dense packed params;
           out_ref: [bb, 128] slab (cols 0:3 cls, col 3 mlr, cols 4:12 attention scores)."""
        f32 = jnp.float32
        x = x_ref[...]                                   # [bb, 16] f32

        # ---- static carve-outs of the dense parameter buffer (tiny masked loads) ----
        w_att  = p_ref[0:64, 0:HIDDEN]                   # [64,8] attention_layer weight (in,out)
        s_mat  = p_ref[0:64, HIDDEN:2 * HIDDEN]          # [64,8] segment-sum (j // 8 == n)
        t_mat  = p_ref[0:64, 2 * HIDDEN:3 * HIDDEN]      # [64,8] mod-8 gather (j % 8 == h)
        w_hid  = p_ref[0:16, 3 * HIDDEN:4 * HIDDEN]      # [16,8] attention_hidden_layer weight
        b_att  = p_ref[16:17, 3 * HIDDEN:4 * HIDDEN]     # [1,8]
        b_hid  = p_ref[17:18, 3 * HIDDEN:4 * HIDDEN]     # [1,8]
        w_feat = p_ref[0:16, 64:64 + FEAT_W]             # [16,64] block-diag emb-delta / w_int / w_float
        b_feat = p_ref[16:17, 64:64 + FEAT_W]            # [1,64]  tab0 | b_int | b_float
        t_t    = p_ref[24:32, 64:64 + FEAT_W]            # [8,64]  tile:   col j <- h == j % 8
        s_t    = p_ref[32:40, 64:64 + FEAT_W]            # [8,64]  expand: col j <- n == j // 8
        w_out  = p_ref[64:80, :]                         # [16,128] fused heads + score placement
        b_out  = p_ref[80:81, :]                         # [1,128]  fused head biases

        # ---- feature_merged = [cat_emb_0..5 | int_value | float_value] (one matmul) ----
        fm = jnp.dot(x, w_feat, preferred_element_type=f32) + b_feat              # [bb,64]

        # ---- attention_hidden = attention_layer(feature_merged) ----
        att = jnp.dot(fm, w_att, preferred_element_type=f32) + b_att              # [bb,8]

        # ---- attention_scores = bmm(feature_stack, att_hidden) (flat-layout via MXU) ----
        att_tiled = jnp.dot(att, t_t, preferred_element_type=f32)                 # [bb,64]
        scores = jnp.dot(fm * att_tiled, s_mat, preferred_element_type=f32)       # [bb,8]

        # ---- softmax over the N features ----
        m = jnp.max(scores, axis=-1, keepdims=True)
        e = jnp.exp(scores - m)
        denom = jnp.sum(e, axis=-1, keepdims=True)
        if approx_softmax:
            p = e * pl.reciprocal(denom, approx=True)                             # EUP slot
        else:
            p = e / denom

        # ---- context_vec = bmm(softmax, feature_stack) (flat-layout via MXU) ----
        p_exp = jnp.dot(p, s_t, preferred_element_type=f32)                       # [bb,64]
        ctx = jnp.dot(p_exp * fm, t_mat, preferred_element_type=f32)              # [bb,8]

        # ---- final_hidden = tanh(attention_hidden_layer([att | ctx])) : one merged matmul ----
        att_ctx = jnp.concatenate([att, ctx], axis=-1)                            # [bb,16]
        final_hidden = jnp.tanh(
            jnp.dot(att_ctx, w_hid, preferred_element_type=f32) + b_hid)          # [bb,8]

        # ---- fused task heads + score placement : one merged matmul, one unmasked store ----
        head_in = jnp.concatenate([final_hidden, scores], axis=-1)                # [bb,16]
        out_ref[...] = (jnp.dot(head_in, w_out, preferred_element_type=f32)
                        + b_out)                                                  # [bb,128]

    return chemberta_kernel


# ------------------------------- wrapper ----------------------------------
def chemberta_forward(packed_params, cat_idx, int_feats, float_feats, *,
                      batch_block=2048, exact_softmax=False):
    """Fused forward pass. cat_idx values must be in {0, 1} (2-row embeddings)."""
    B = cat_idx.shape[0]
    x = jnp.concatenate(
        [cat_idx.astype(jnp.float32),
         int_feats.astype(jnp.float32),
         float_feats.astype(jnp.float32),
         jnp.zeros((B, 1), jnp.float32)],           # pad column (zero weight row)
        axis=-1)                                    # [B, 16]

    # --- batch block selection: bounded bb, batch padded, >=2 parallel steps when possible ---
    B8 = _round_up(B, 8)                            # sublane-aligned batch
    if B8 <= 8:
        bb = B8
    else:
        bb = min(batch_block, _round_up(-(-B8 // 2), 8))   # at least 2 grid steps (v7x megacore)
    B_pad = _round_up(B8, bb)
    n_steps = B_pad // bb
    if B_pad > B:
        x = jnp.pad(x, ((0, B_pad - B), (0, 0)))    # zero rows are harmless, sliced off below

    kernel = _make_kernel(approx_softmax=not exact_softmax)
    flops = FLOPS_PER_ROW * B_pad
    transcendentals = TRANS_PER_ROW * B_pad
    bytes_accessed = 4 * (P_ROWS * 128) + 4 * B_pad * (X_W + OUT_W)

    def run(single_buffer_params):
        p_spec_kwargs = {}
        if single_buffer_params:
            # parameter block index never changes across the grid -> one buffer is enough
            p_spec_kwargs = dict(pipeline_mode=pl.Buffered(1))
        call = pl.pallas_call(
            kernel,
            out_shape=jax.ShapeDtypeStruct((B_pad, OUT_W), jnp.float32),
            grid=(n_steps,),
            in_specs=[
                pl.BlockSpec((bb, X_W), lambda i: (i, 0)),
                pl.BlockSpec((P_ROWS, 128), lambda i: (0, 0), **p_spec_kwargs),
            ],
            out_specs=pl.BlockSpec((bb, OUT_W), lambda i: (i, 0)),
            compiler_params=pltpu.CompilerParams(dimension_semantics=("parallel",)),
            cost_estimate=pl.CostEstimate(flops=flops,
                                          transcendentals=transcendentals,
                                          bytes_accessed=bytes_accessed),
        )
        return call(x, packed_params)

    try:
        slab = run(single_buffer_params=True)
    except Exception:
        # pl.Buffered(1) not supported on this jax/mosaic version -> default double buffering
        slab = run(single_buffer_params=False)

    task_outputs = {
        "task_cls": slab[:B, 0:NUM_CLASSES],                 # [B, 3]
        "task_mlr": slab[:B, NUM_CLASSES],                   # [B]  (squeeze(-1) of [B,1])
    }
    attn_scores = slab[:B, SCORE_COL0:SCORE_COL0 + N_FEAT]   # [B, 8]
    return task_outputs, attn_scores


# ------------------------- host-side parameter packing ----------------------
def pack_params(params, dtype=jnp.float32):
    """Densely pack all weights/biases + the 0/1 selection constants into one [88,128] buffer.

    dtype=jnp.bfloat16 halves the parameter DMA (selection matrices / embedding deltas are
    exact in bf16) but requires relaxing the validation tolerance to ~3e-3.
    """
    emb = np.asarray(params["emb"], np.float32)      # [F, 2, H]
    tab0 = emb[:, 0, :]                              # [F, H]
    delta = emb[:, 1, :] - tab0                      # [F, H]

    # fused feature layer: x[B,16] @ w_feat[16,64] + b_feat -> feature_merged
    w_feat = np.zeros((X_W, FEAT_W), np.float32)
    for i in range(F_COLS):
        w_feat[i, HIDDEN * i:HIDDEN * (i + 1)] = delta[i]
    w_feat[F_COLS:F_COLS + INT_DIM,
           F_COLS * HIDDEN:(F_COLS + 1) * HIDDEN] = np.asarray(params["w_int"])
    w_feat[F_COLS + INT_DIM:F_COLS + INT_DIM + FLOAT_DIM,
           (F_COLS + 1) * HIDDEN:(F_COLS + 2) * HIDDEN] = np.asarray(params["w_float"])
    b_feat = np.concatenate([tab0.reshape(-1),
                             np.asarray(params["b_int"]).reshape(-1),
                             np.asarray(params["b_float"]).reshape(-1)])        # [64]

    # selection constants (block structure of feature_merged)
    j = np.arange(FEAT_W)
    S = (j[:, None] // HIDDEN == np.arange(N_FEAT)[None, :]).astype(np.float32)  # [64,8] segment-sum
    T = (j[:, None] % HIDDEN == np.arange(HIDDEN)[None, :]).astype(np.float32)   # [64,8] mod-8 gather

    # fused task heads + attention-score placement, applied to concat([final_hidden, scores])
    w_out = np.zeros((2 * HIDDEN, OUT_W), np.float32)
    w_out[0:HIDDEN, 0:NUM_CLASSES] = np.asarray(params["w_cls"])
    w_out[0:HIDDEN, NUM_CLASSES:NUM_CLASSES + 1] = np.asarray(params["w_mlr"])
    w_out[HIDDEN:2 * HIDDEN, SCORE_COL0:SCORE_COL0 + N_FEAT] = np.eye(N_FEAT, dtype=np.float32)
    b_out = np.zeros(OUT_W, np.float32)
    b_out[0:NUM_CLASSES] = np.asarray(params["b_cls"])[0]
    b_out[NUM_CLASSES] = np.asarray(params["b_mlr"])[0, 0]

    P = np.zeros((P_ROWS, 128), np.float32)
    # 8-wide stripes share rows 0:64, lanes 0:32
    P[0:64, 0:HIDDEN] = np.asarray(params["w_att"])
    P[0:64, HIDDEN:2 * HIDDEN] = S                   # s_mat
    P[0:64, 2 * HIDDEN:3 * HIDDEN] = T               # t_mat
    P[0:16, 3 * HIDDEN:4 * HIDDEN] = np.asarray(params["w_hid"])
    P[16, 3 * HIDDEN:4 * HIDDEN] = np.asarray(params["b_att"])[0]
    P[17, 3 * HIDDEN:4 * HIDDEN] = np.asarray(params["b_hid"])[0]
    # 64-wide blocks live in lanes 64:128 of the same rows
    P[0:16, 64:64 + FEAT_W] = w_feat
    P[16, 64:64 + FEAT_W] = b_feat
    P[24:32, 64:64 + FEAT_W] = T.T                   # t_t   (tile att_hidden)
    P[32:40, 64:64 + FEAT_W] = S.T                   # s_t   (expand softmax probs)
    # full-width fused head block
    P[64:80, :] = w_out
    P[80, :] = b_out
    return jnp.asarray(P).astype(dtype)


# ------------------------- pure-JAX reference ------------------------------
def chemberta_reference(params, cat_idx, int_feats, float_feats):
    idx = cat_idx.astype(jnp.float32)
    tab0, tab1 = params["emb"][:, 0, :], params["emb"][:, 1, :]
    cat_embs = (1.0 - idx)[:, :, None] * tab0[None] + idx[:, :, None] * tab1[None]
    int_value = int_feats @ params["w_int"] + params["b_int"]
    float_value = float_feats @ params["w_float"] + params["b_float"]
    feature_merged = jnp.concatenate(
        [cat_embs.reshape(cat_idx.shape[0], -1), int_value, float_value], axis=-1)
    att_hidden = feature_merged @ params["w_att"] + params["b_att"]
    stack = jnp.concatenate([cat_embs, int_value[:, None, :], float_value[:, None, :]], axis=1)
    scores = jnp.einsum("bnh,bh->bn", stack, att_hidden)
    p = jax.nn.softmax(scores, axis=-1)
    ctx = jnp.einsum("bn,bnh->bh", p, stack)
    final_hidden = jnp.tanh(
        jnp.concatenate([att_hidden, ctx], -1) @ params["w_hid"] + params["b_hid"])
    cls = final_hidden @ params["w_cls"] + params["b_cls"]
    mlr = (final_hidden @ params["w_mlr"] + params["b_mlr"])[:, 0]
    return {"task_cls": cls, "task_mlr": mlr}, scores


# --------------------------------- main ------------------------------------
def init_params(key):
    ks = jax.random.split(key, 13)
    init = lambda k, shape, scale=0.1: (scale * jax.random.normal(k, shape)).astype(jnp.float32)
    return dict(
        emb=init(ks[0], (F_COLS, 2, HIDDEN)),
        w_int=init(ks[1], (INT_DIM, HIDDEN)), b_int=init(ks[2], (1, HIDDEN)),
        w_float=init(ks[3], (FLOAT_DIM, HIDDEN)), b_float=init(ks[4], (1, HIDDEN)),
        w_att=init(ks[5], (N_FEAT * HIDDEN, HIDDEN)), b_att=init(ks[6], (1, HIDDEN)),
        w_hid=init(ks[7], (2 * HIDDEN, HIDDEN)), b_hid=init(ks[8], (1, HIDDEN)),
        w_cls=init(ks[9], (HIDDEN, NUM_CLASSES)), b_cls=init(ks[10], (1, NUM_CLASSES)),
        w_mlr=init(ks[11], (HIDDEN, 1)), b_mlr=init(ks[12], (1, 1)),
    )


if __name__ == "__main__":
    key = jax.random.PRNGKey(0)
    kp, k1, k2, k3 = jax.random.split(key, 4)
    params = init_params(kp)
    packed_params = pack_params(params)          # f32 demo; pass dtype=jnp.bfloat16 to halve DMA

    cat_idx = jax.random.bernoulli(k1, 0.5, (BATCH, F_COLS)).astype(jnp.int32)   # indices in {0,1}
    int_feats = jax.random.normal(k2, (BATCH, INT_DIM), dtype=jnp.float32)
    float_feats = jax.random.normal(k3, (BATCH, FLOAT_DIM), dtype=jnp.float32)

    task_out, attn_scores = chemberta_forward(packed_params, cat_idx, int_feats, float_feats)
    jax.block_until_ready((task_out, attn_scores))

    ref_out, ref_scores = chemberta_reference(params, cat_idx, int_feats, float_feats)
    # tolerance accounts for the EUP approximate reciprocal in the softmax
    assert jnp.allclose(task_out["task_cls"], ref_out["task_cls"], rtol=1e-3, atol=1e-3)
    assert jnp.allclose(task_out["task_mlr"], ref_out["task_mlr"], rtol=1e-3, atol=1e-3)
    assert jnp.allclose(attn_scores, ref_scores, rtol=1e-3, atol=1e-3)

    print("KERNEL_OK")
</pallas_src>

<mosaic_0001>
module attributes {stable_mosaic.version = 11 : i64} {
  func.func @chemberta_kernel(%arg0: i32, %arg1: memref<8x16xf32, #tpu.memory_space<vmem>>, %arg2: memref<88x128xf32, #tpu.memory_space<vmem>>, %arg3: memref<8x128xf32, #tpu.memory_space<vmem>>) attributes {dimension_semantics = [#tpu.dimension_semantics<parallel>], iteration_bounds = array<i64: 1>, scalar_prefetch = 0 : i64, scratch_operands = 0 : i64, tpu.core_type = #tpu.core_type<tc>, window_params = [{transform_indices = @transform_0, window_bounds = array<i64: 8, 16>}, {pipeline_mode = #tpu.pipeline_mode<synchronous>, transform_indices = @transform_1, window_bounds = array<i64: 88, 128>}, {transform_indices = @transform_2, window_bounds = array<i64: 8, 128>}]} {
    %c0 = arith.constant 0 : index
    %c0_0 = arith.constant 0 : index
    %0 = vector.load %arg1[%c0, %c0_0] : memref<8x16xf32, #tpu.memory_space<vmem>>, vector<8x16xf32>
    %c0_1 = arith.constant 0 : index
    %c0_2 = arith.constant 0 : index
    %1 = vector.load %arg2[%c0_1, %c0_2] : memref<88x128xf32, #tpu.memory_space<vmem>>, vector<64x8xf32>
    %c0_3 = arith.constant 0 : index
    %c8 = arith.constant 8 : index
    %2 = vector.load %arg2[%c0_3, %c8] : memref<88x128xf32, #tpu.memory_space<vmem>>, vector<64x8xf32>
    %c0_4 = arith.constant 0 : index
    %c16 = arith.constant 16 : index
    %3 = vector.load %arg2[%c0_4, %c16] : memref<88x128xf32, #tpu.memory_space<vmem>>, vector<64x8xf32>
    %c0_5 = arith.constant 0 : index
    %c24 = arith.constant 24 : index
    %4 = vector.load %arg2[%c0_5, %c24] : memref<88x128xf32, #tpu.memory_space<vmem>>, vector<16x8xf32>
    %c16_6 = arith.constant 16 : index
    %c24_7 = arith.constant 24 : index
    %5 = vector.load %arg2[%c16_6, %c24_7] : memref<88x128xf32, #tpu.memory_space<vmem>>, vector<1x8xf32>
    %c17 = arith.constant 17 : index
    %c24_8 = arith.constant 24 : index
    %6 = vector.load %arg2[%c17, %c24_8] : memref<88x128xf32, #tpu.memory_space<vmem>>, vector<1x8xf32>
    %c0_9 = arith.constant 0 : index
    %c64 = arith.constant 64 : index
    %7 = vector.load %arg2[%c0_9, %c64] : memref<88x128xf32, #tpu.memory_space<vmem>>, vector<16x64xf32>
    %c16_10 = arith.constant 16 : index
    %c64_11 = arith.constant 64 : index
    %8 = vector.load %arg2[%c16_10, %c64_11] : memref<88x128xf32, #tpu.memory_space<vmem>>, vector<1x64xf32>
    %c24_12 = arith.constant 24 : index
    %c64_13 = arith.constant 64 : index
    %9 = vector.load %arg2[%c24_12, %c64_13] : memref<88x128xf32, #tpu.memory_space<vmem>>, vector<8x64xf32>
    %c32 = arith.constant 32 : index
    %c64_14 = arith.constant 64 : index
    %10 = vector.load %arg2[%c32, %c64_14] : memref<88x128xf32, #tpu.memory_space<vmem>>, vector<8x64xf32>
    %c64_15 = arith.constant 64 : index
    %c0_16 = arith.constant 0 : index
    %11 = vector.load %arg2[%c64_15, %c0_16] : memref<88x128xf32, #tpu.memory_space<vmem>>, vector<16x128xf32>
    %c80 = arith.constant 80 : index
    %c0_17 = arith.constant 0 : index
    %12 = vector.load %arg2[%c80, %c0_17] : memref<88x128xf32, #tpu.memory_space<vmem>>, vector<1x128xf32>
    %cst = arith.constant dense<0.000000e+00> : vector<8x64xf32>
    %13 = tpu.matmul %0, %7, %cst {dimension_numbers = #tpu.dot_dimension_numbers<[1], [0], [0], [1], [0, 0, 1, 1], [], []>} : vector<8x16xf32>, vector<16x64xf32>, vector<8x64xf32> -> vector<8x64xf32>
    %14 = vector.broadcast %8 : vector<1x64xf32> to vector<8x64xf32>
    %15 = arith.addf %13, %14 : vector<8x64xf32>
    %cst_18 = arith.constant dense<0.000000e+00> : vector<8x8xf32>
    %16 = tpu.matmul %15, %1, %cst_18 {dimension_numbers = #tpu.dot_dimension_numbers<[1], [0], [0], [1], [0, 0, 1, 1], [], []>} : vector<8x64xf32>, vector<64x8xf32>, vector<8x8xf32> -> vector<8x8xf32>
    %17 = vector.broadcast %5 : vector<1x8xf32> to vector<8x8xf32>
    %18 = arith.addf %16, %17 : vector<8x8xf32>
    %cst_19 = arith.constant dense<0.000000e+00> : vector<8x64xf32>
    %19 = tpu.matmul %18, %9, %cst_19 {dimension_numbers = #tpu.dot_dimension_numbers<[1], [0], [0], [1], [0, 0, 1, 1], [], []>} : vector<8x8xf32>, vector<8x64xf32>, vector<8x64xf32> -> vector<8x64xf32>
    %20 = arith.mulf %15, %19 : vector<8x64xf32>
    %cst_20 = arith.constant dense<0.000000e+00> : vector<8x8xf32>
    %21 = tpu.matmul %20, %2, %cst_20 {dimension_numbers = #tpu.dot_dimension_numbers<[1], [0], [0], [1], [0, 0, 1, 1], [], []>} : vector<8x64xf32>, vector<64x8xf32>, vector<8x8xf32> -> vector<8x8xf32>
    %cst_21 = arith.constant dense<0xFF800000> : vector<8xf32>
    %22 = vector.multi_reduction <maximumf>, %21, %cst_21 [1] : vector<8x8xf32> to vector<8xf32>
    %23 = vector.shape_cast %22 : vector<8xf32> to vector<8x1xf32>
    %24 = vector.broadcast %23 : vector<8x1xf32> to vector<8x8xf32>
    %25 = arith.subf %21, %24 : vector<8x8xf32>
    %26 = math.exp %25 : vector<8x8xf32>
    %cst_22 = arith.constant dense<0.000000e+00> : vector<8xf32>
    %27 = vector.multi_reduction <add>, %26, %cst_22 [1] : vector<8x8xf32> to vector<8xf32>
    %28 = vector.shape_cast %27 : vector<8xf32> to vector<8x1xf32>
    %29 = tpu.reciprocal %28 {approx = true} : vector<8x1xf32> -> vector<8x1xf32>
    %30 = vector.broadcast %29 : vector<8x1xf32> to vector<8x8xf32>
    %31 = arith.mulf %26, %30 : vector<8x8xf32>
    %cst_23 = arith.constant dense<0.000000e+00> : vector<8x64xf32>
    %32 = tpu.matmul %31, %10, %cst_23 {dimension_numbers = #tpu.dot_dimension_numbers<[1], [0], [0], [1], [0, 0, 1, 1], [], []>} : vector<8x8xf32>, vector<8x64xf32>, vector<8x64xf32> -> vector<8x64xf32>
    %33 = arith.mulf %32, %15 : vector<8x64xf32>
    %cst_24 = arith.constant dense<0.000000e+00> : vector<8x8xf32>
    %34 = tpu.matmul %33, %3, %cst_24 {dimension_numbers = #tpu.dot_dimension_numbers<[1], [0], [0], [1], [0, 0, 1, 1], [], []>} : vector<8x64xf32>, vector<64x8xf32>, vector<8x8xf32> -> vector<8x8xf32>
    %35 = tpu.concatenate %18, %34 in 1 : vector<8x8xf32>, vector<8x8xf32> -> vector<8x16xf32>
    %cst_25 = arith.constant dense<0.000000e+00> : vector<8x8xf32>
    %36 = tpu.matmul %35, %4, %cst_25 {dimension_numbers = #tpu.dot_dimension_numbers<[1], [0], [0], [1], [0, 0, 1, 1], [], []>} : vector<8x16xf32>, vector<16x8xf32>, vector<8x8xf32> -> vector<8x8xf32>
    %37 = vector.broadcast %6 : vector<1x8xf32> to vector<8x8xf32>
    %38 = arith.addf %36, %37 : vector<8x8xf32>
    %39 = math.tanh %38 : vector<8x8xf32>
    %40 = tpu.concatenate %39, %21 in 1 : vector<8x8xf32>, vector<8x8xf32> -> vector<8x16xf32>
    %cst_26 = arith.constant dense<0.000000e+00> : vector<8x128xf32>
    %41 = tpu.matmul %40, %11, %cst_26 {dimension_numbers = #tpu.dot_dimension_numbers<[1], [0], [0], [1], [0, 0, 1, 1], [], []>} : vector<8x16xf32>, vector<16x128xf32>, vector<8x128xf32> -> vector<8x128xf32>
    %42 = vector.broadcast %12 : vector<1x128xf32> to vector<8x128xf32>
    %43 = arith.addf %41, %42 : vector<8x128xf32>
    %c0_27 = arith.constant 0 : index
    %c0_28 = arith.constant 0 : index
    %44 = vector.load %arg3[%c0_27, %c0_28] : memref<8x128xf32, #tpu.memory_space<vmem>>, vector<8x128xf32>
    tpu.vector_store %arg3[%c0_27, %c0_28], %43 {strides = array<i32>} : memref<8x128xf32, #tpu.memory_space<vmem>>, vector<8x128xf32>,
    return
  }
  func.func @transform_0(%arg0: i32) -> (i32, i32) {
    %c0_i32 = arith.constant 0 : i32
    %c0_i32_0 = arith.constant 0 : i32
    return %arg0, %c0_i32 : i32, i32
  }
  func.func @transform_1(%arg0: i32) -> (i32, i32) {
    %c0_i32 = arith.constant 0 : i32
    %c0_i32_0 = arith.constant 0 : i32
    %c0_i32_1 = arith.constant 0 : i32
    return %c0_i32, %c0_i32_0 : i32, i32
  }
  func.func @transform_2(%arg0: i32) -> (i32, i32) {
    %c0_i32 = arith.constant 0 : i32
    %c0_i32_0 = arith.constant 0 : i32
    return %arg0, %c0_i32 : i32, i32
  }
}

module attributes {stable_mosaic.version = 11 : i64} {
  func.func @chemberta_kernel(%arg0: i32, %arg1: memref<8x16xf32, #tpu.memory_space<vmem>>, %arg2: memref<88x128xf32, #tpu.memory_space<vmem>>, %arg3: memref<8x128xf32, #tpu.memory_space<vmem>>) attributes {dimension_semantics = [#tpu.dimension_semantics<parallel>], iteration_bounds = array<i64: 1>, scalar_prefetch = 0 : i64, scratch_operands = 0 : i64, tpu.core_type = #tpu.core_type<tc>, window_params = [{transform_indices = @transform_0, window_bounds = array<i64: 8, 16>}, {pipeline_mode = #tpu.pipeline_mode<synchronous>, transform_indices = @transform_1, window_bounds = array<i64: 88, 128>}, {transform_indices = @transform_2, window_bounds = array<i64: 8, 128>}]} {
    %c0 = arith.constant 0 : index
    %c0_0 = arith.constant 0 : index
    %0 = vector.load %arg1[%c0, %c0_0] : memref<8x16xf32, #tpu.memory_space<vmem>>, vector<8x16xf32>
    %c0_1 = arith.constant 0 : index
    %c0_2 = arith.constant 0 : index
    %1 = vector.load %arg2[%c0_1, %c0_2] : memref<88x128xf32, #tpu.memory_space<vmem>>, vector<64x8xf32>
    %c0_3 = arith.constant 0 : index
    %c8 = arith.constant 8 : index
    %2 = vector.load %arg2[%c0_3, %c8] : memref<88x128xf32, #tpu.memory_space<vmem>>, vector<64x8xf32>
    %c0_4 = arith.constant 0 : index
    %c16 = arith.constant 16 : index
    %3 = vector.load %arg2[%c0_4, %c16] : memref<88x128xf32, #tpu.memory_space<vmem>>, vector<64x8xf32>
    %c0_5 = arith.constant 0 : index
    %c24 = arith.constant 24 : index
    %4 = vector.load %arg2[%c0_5, %c24] : memref<88x128xf32, #tpu.memory_space<vmem>>, vector<16x8xf32>
    %c16_6 = arith.constant 16 : index
    %c24_7 = arith.constant 24 : index
    %5 = vector.load %arg2[%c16_6, %c24_7] : memref<88x128xf32, #tpu.memory_space<vmem>>, vector<1x8xf32>
    %c17 = arith.constant 17 : index
    %c24_8 = arith.constant 24 : index
    %6 = vector.load %arg2[%c17, %c24_8] : memref<88x128xf32, #tpu.memory_space<vmem>>, vector<1x8xf32>
    %c0_9 = arith.constant 0 : index
    %c64 = arith.constant 64 : index
    %7 = vector.load %arg2[%c0_9, %c64] : memref<88x128xf32, #tpu.memory_space<vmem>>, vector<16x64xf32>
    %c16_10 = arith.constant 16 : index
    %c64_11 = arith.constant 64 : index
    %8 = vector.load %arg2[%c16_10, %c64_11] : memref<88x128xf32, #tpu.memory_space<vmem>>, vector<1x64xf32>
    %c24_12 = arith.constant 24 : index
    %c64_13 = arith.constant 64 : index
    %9 = vector.load %arg2[%c24_12, %c64_13] : memref<88x128xf32, #tpu.memory_space<vmem>>, vector<8x64xf32>
    %c32 = arith.constant 32 : index
    %c64_14 = arith.constant 64 : index
    %10 = vector.load %arg2[%c32, %c64_14] : memref<88x128xf32, #tpu.memory_space<vmem>>, vector<8x64xf32>
    %c64_15 = arith.constant 64 : index
    %c0_16 = arith.constant 0 : index
    %11 = vector.load %arg2[%c64_15, %c0_16] : memref<88x128xf32, #tpu.memory_space<vmem>>, vector<16x128xf32>
    %c80 = arith.constant 80 : index
    %c0_17 = arith.constant 0 : index
    %12 = vector.load %arg2[%c80, %c0_17] : memref<88x128xf32, #tpu.memory_space<vmem>>, vector<1x128xf32>
    %cst = arith.constant dense<0.000000e+00> : vector<8x64xf32>
    %13 = tpu.matmul %0, %7, %cst {dimension_numbers = #tpu.dot_dimension_numbers<[1], [0], [0], [1], [0, 0, 1, 1], [], []>} : vector<8x16xf32>, vector<16x64xf32>, vector<8x64xf32> -> vector<8x64xf32>
    %14 = vector.broadcast %8 : vector<1x64xf32> to vector<8x64xf32>
    %15 = arith.addf %13, %14 : vector<8x64xf32>
    %cst_18 = arith.constant dense<0.000000e+00> : vector<8x8xf32>
    %16 = tpu.matmul %15, %1, %cst_18 {dimension_numbers = #tpu.dot_dimension_numbers<[1], [0], [0], [1], [0, 0, 1, 1], [], []>} : vector<8x64xf32>, vector<64x8xf32>, vector<8x8xf32> -> vector<8x8xf32>
    %17 = vector.broadcast %5 : vector<1x8xf32> to vector<8x8xf32>
    %18 = arith.addf %16, %17 : vector<8x8xf32>
    %cst_19 = arith.constant dense<0.000000e+00> : vector<8x64xf32>
    %19 = tpu.matmul %18, %9, %cst_19 {dimension_numbers = #tpu.dot_dimension_numbers<[1], [0], [0], [1], [0, 0, 1, 1], [], []>} : vector<8x8xf32>, vector<8x64xf32>, vector<8x64xf32> -> vector<8x64xf32>
    %20 = arith.mulf %15, %19 : vector<8x64xf32>
    %cst_20 = arith.constant dense<0.000000e+00> : vector<8x8xf32>
    %21 = tpu.matmul %20, %2, %cst_20 {dimension_numbers = #tpu.dot_dimension_numbers<[1], [0], [0], [1], [0, 0, 1, 1], [], []>} : vector<8x64xf32>, vector<64x8xf32>, vector<8x8xf32> -> vector<8x8xf32>
    %cst_21 = arith.constant dense<0xFF800000> : vector<8xf32>
    %22 = vector.multi_reduction <maximumf>, %21, %cst_21 [1] : vector<8x8xf32> to vector<8xf32>
    %23 = vector.shape_cast %22 : vector<8xf32> to vector<8x1xf32>
    %24 = vector.broadcast %23 : vector<8x1xf32> to vector<8x8xf32>
    %25 = arith.subf %21, %24 : vector<8x8xf32>
    %26 = math.exp %25 : vector<8x8xf32>
    %cst_22 = arith.constant dense<0.000000e+00> : vector<8xf32>
    %27 = vector.multi_reduction <add>, %26, %cst_22 [1] : vector<8x8xf32> to vector<8xf32>
    %28 = vector.shape_cast %27 : vector<8xf32> to vector<8x1xf32>
    %29 = tpu.reciprocal %28 {approx = true} : vector<8x1xf32> -> vector<8x1xf32>
    %30 = vector.broadcast %29 : vector<8x1xf32> to vector<8x8xf32>
    %31 = arith.mulf %26, %30 : vector<8x8xf32>
    %cst_23 = arith.constant dense<0.000000e+00> : vector<8x64xf32>
    %32 = tpu.matmul %31, %10, %cst_23 {dimension_numbers = #tpu.dot_dimension_numbers<[1], [0], [0], [1], [0, 0, 1, 1], [], []>} : vector<8x8xf32>, vector<8x64xf32>, vector<8x64xf32> -> vector<8x64xf32>
    %33 = arith.mulf %32, %15 : vector<8x64xf32>
    %cst_24 = arith.constant dense<0.000000e+00> : vector<8x8xf32>
    %34 = tpu.matmul %33, %3, %cst_24 {dimension_numbers = #tpu.dot_dimension_numbers<[1], [0], [0], [1], [0, 0, 1, 1], [], []>} : vector<8x64xf32>, vector<64x8xf32>, vector<8x8xf32> -> vector<8x8xf32>
    %35 = tpu.concatenate %18, %34 in 1 : vector<8x8xf32>, vector<8x8xf32> -> vector<8x16xf32>
    %cst_25 = arith.constant dense<0.000000e+00> : vector<8x8xf32>
    %36 = tpu.matmul %35, %4, %cst_25 {dimension_numbers = #tpu.dot_dimension_numbers<[1], [0], [0], [1], [0, 0, 1, 1], [], []>} : vector<8x16xf32>, vector<16x8xf32>, vector<8x8xf32> -> vector<8x8xf32>
    %37 = vector.broadcast %6 : vector<1x8xf32> to vector<8x8xf32>
    %38 = arith.addf %36, %37 : vector<8x8xf32>
    %39 = math.tanh %38 : vector<8x8xf32>
    %40 = tpu.concatenate %39, %21 in 1 : vector<8x8xf32>, vector<8x8xf32> -> vector<8x16xf32>
    %cst_26 = arith.constant dense<0.000000e+00> : vector<8x128xf32>
    %41 = tpu.matmul %40, %11, %cst_26 {dimension_numbers = #tpu.dot_dimension_numbers<[1], [0], [0], [1], [0, 0, 1, 1], [], []>} : vector<8x16xf32>, vector<16x128xf32>, vector<8x128xf32> -> vector<8x128xf32>
    %42 = vector.broadcast %12 : vector<1x128xf32> to vector<8x128xf32>
    %43 = arith.addf %41, %42 : vector<8x128xf32>
    %c0_27 = arith.constant 0 : index
    %c0_28 = arith.constant 0 : index
    %44 = vector.load %arg3[%c0_27, %c0_28] : memref<8x128xf32, #tpu.memory_space<vmem>>, vector<8x128xf32>
    tpu.vector_store %arg3[%c0_27, %c0_28], %43 {strides = array<i32>} : memref<8x128xf32, #tpu.memory_space<vmem>>, vector<8x128xf32>,
    return
  }
  func.func @transform_0(%arg0: i32) -> (i32, i32) {
    %c0_i32 = arith.constant 0 : i32
    %c0_i32_0 = arith.constant 0 : i32
    return %arg0, %c0_i32 : i32, i32
  }
  func.func @transform_1(%arg0: i32) -> (i32, i32) {
    %c0_i32 = arith.constant 0 : i32
    %c0_i32_0 = arith.constant 0 : i32
    %c0_i32_1 = arith.constant 0 : i32
    return %c0_i32, %c0_i32_0 : i32, i32
  }
  func.func @transform_2(%arg0: i32) -> (i32, i32) {
    %c0_i32 = arith.constant 0 : i32
    %c0_i32_0 = arith.constant 0 : i32
    return %arg0, %c0_i32 : i32, i32
  }
}

</mosaic_0001>

<llo_original>
// kernel: tpu_custom_call.1
$region0: #{tpu_custom_call.1}
  #allocation0 [shape = 'u32[]', space=smem, size = 0x4, offset = 0x4, fixed_abs, tag = 'smem constant byte address 0x4 - core index']
  #allocation1 [shape = 'u32[144,128]{1,0:T(1,128)}', space=vmem, size = 0x12000, scoped, tag = 'internal scratch']
  %s0 = inlined_call_operand.hbm [shape: f32[8,16], index: 0, kind: input, shape index: {}]
  %s1 = inlined_call_operand.hbm [shape: f32[88,128], index: 1, kind: input, shape index: {}]
  %s2 = inlined_call_operand.hbm [shape: f32[8,128], index: 2, kind: output, shape index: {}]
  %s3 = sld [smem:[#allocation0]]
  $region26: #{tpu_custom_call.1} parent=0
    _
  %s5 = ssub.s32 1, %s3
  %s6 = scalar_select 0, %s5, %s3
  $region1: #{tpu_custom_call.1} parent=0
    #allocation2 [shape = 'u8[4096]{0}', space=vmem, size = 0x1000, scoped, tag = 'input window, operand 0, single buffered']
    #allocation3 [shape = 's32[1]{0}', space=sflag, size = 0x4, scoped, tag = 'scoped memory for tpu_custom_call.1']
    #allocation4 [shape = 's32[1]{0}', space=sflag, size = 0x4, scoped, tag = 'scoped memory for tpu_custom_call.1']
    #allocation5 [shape = 'u8[45056]{0}', space=vmem, size = 0xb000, scoped, tag = 'input window, operand 1, single buffered']
    #allocation6 [shape = 's32[1]{0}', space=sflag, size = 0x4, scoped, tag = 'scoped memory for tpu_custom_call.1']
    #allocation7 [shape = 'u8[4096]{0}', space=vmem, size = 0x1000, scoped, tag = 'output window, operand 0, single buffered']
    %7 = vsyncpa [#allocation3], 0
    %8 = vsyncpa [#allocation6], 0
    %9 = vsyncpa [#allocation4], 0
    // Predicated region
    $region2: #{tpu_custom_call.1} parent=1 // pred_check
      _
    $region3: #{tpu_custom_call.1} parent=1 // pred_check_branch
      %11 = sbr.rel (0) target = $region5
    $region4: #{tpu_custom_call.1} parent=1 // pred_region
      %s13 = ssub.s32 128, 128
      %14 = vsyncadd [#allocation3], %s13
      %s16 = sshll.u32 [#allocation2], 4
      %s17 = int_to_ptr.vmem [resolvable:$true] %s16
      %19 = dma.hbm_to_vmem [thread:$0]  %s0, 128, %s17, [#allocation3]
    $region5: #{tpu_custom_call.1} parent=1 // pred_fallthru
      _
    // Predicated region
    $region6: #{tpu_custom_call.1} parent=1 // pred_check
      _
    $region7: #{tpu_custom_call.1} parent=1 // pred_check_branch
      %21 = sbr.rel (0) target = $region9
    $region8: #{tpu_custom_call.1} parent=1 // pred_region
      %s23 = ssub.s32 1408, 1408
      %24 = vsyncadd [#allocation6], %s23
      %s25 = sshll.u32 [#allocation5], 4
      %s26 = int_to_ptr.vmem [resolvable:$true] %s25
      %31 = dma.hbm_to_vmem [thread:$0]  %s1, 1408, %s26, [#allocation6], 128, 128, 8
    $region9: #{tpu_custom_call.1} parent=1 // pred_fallthru
      _
    // Predicated region
    $region10: #{tpu_custom_call.1} parent=1 // pred_check
      _
    $region11: #{tpu_custom_call.1} parent=1 // pred_check_branch
      %33 = sbr.rel (0) target = $region13
    $region12: #{tpu_custom_call.1} parent=1 // pred_region
      %34 = dma.done [#allocation3], 128
    $region13: #{tpu_custom_call.1} parent=1 // pred_fallthru
      _
    // Predicated region
    $region14: #{tpu_custom_call.1} parent=1 // pred_check
      _
    $region15: #{tpu_custom_call.1} parent=1 // pred_check_branch
      %36 = sbr.rel (0) target = $region17
    $region16: #{tpu_custom_call.1} parent=1 // pred_region
      %37 = dma.done [#allocation6], 1408
    $region17: #{tpu_custom_call.1} parent=1 // pred_fallthru
      _
    %v38 = vld [vmem:[#allocation2] sm:$0xff]
    %v39 = vld [vmem:[#allocation5] sm:$0xff]
    %v40 = vld [vmem:[#allocation5 + $0x8] sm:$0xff]
    %v41 = vld [vmem:[#allocation5 + $0x10] sm:$0xff]
    %v42 = vld [vmem:[#allocation5 + $0x18] sm:$0xff]
    %v43 = vld [vmem:[#allocation5 + $0x20] sm:$0xff]
    %v44 = vld [vmem:[#allocation5 + $0x28] sm:$0xff]
    %v45 = vld [vmem:[#allocation5 + $0x30] sm:$0xff]
    %v46 = vld [vmem:[#allocation5 + $0x38] sm:$0xff]
    %v47 = vld [vmem:[#allocation5 + $0x10] sm:$0x1]
    %v48 = vld [vmem:[#allocation5 + $0x11] sm:$0x1]
    %v49 = vld [vmem:[#allocation5 + $0x40] sm:$0xff]
    %v50 = vld [vmem:[#allocation5 + $0x48] sm:$0xff]
    %v51 = vld [vmem:[#allocation5 + $0x50] sm:$0x1]
    %v52 = vlaneseq
    %v53 = vshrl.u32 %v52, 7
    %v54 = vsub.s32 0, %v53
    %v55 = vrot.slane %v47, %v54
    %58 = vrot.lane.b32.xlu0 %v39, 64
    %v59 = vpop.permute.xlu0 %58
    %60 = vrot.lane.b32.xlu0 %v40, 64
    %v61 = vpop.permute.xlu0 %60
    %65 = vrot.lane.b32.xlu0 %v55, 64
    %v66 = vpop.permute.xlu0 %65
    %vm68 = vcmask 130048
    %v70 = vsel %vm68, %v38, 0
    %72 = vmatprep.subr.mxu0 0.0
    %73 = vmatpush1.msra.mxu0 %v59
    %74 = vmatprep.subr.mxu0 0.0
    %75 = vmatpush1.msra.mxu0 %v61
    %76 = vmatprep.subr.mxu0 0.0
    %77 = vmatpush1.msra.mxu0 0.0
    %78 = vmatprep.subr.mxu0 0.0
    %79 = vmatpush1.msra.mxu0 0.0
    %80 = vmatprep.subr.mxu0 0.0
    %81 = vmatpush1.msra.mxu0 0.0
    %82 = vmatprep.subr.mxu0 0.0
    %83 = vmatpush1.msra.mxu0 0.0
    %84 = vmatprep.subr.mxu0 0.0
    %85 = vmatpush1.msra.mxu0 0.0
    %86 = vmatprep.subr.mxu0 0.0
    %87 = vmatpush1.msra.mxu0 0.0
    %88 = vmatprep.subr.mxu0 0.0
    %89 = vmatpush1.msra.mxu0 0.0
    %90 = vmatprep.subr.mxu0 0.0
    %91 = vmatpush1.msra.mxu0 0.0
    %92 = vmatprep.subr.mxu0 0.0
    %93 = vmatpush1.msra.mxu0 0.0
    %94 = vmatprep.subr.mxu0 0.0
    %95 = vmatpush1.msra.mxu0 0.0
    %96 = vmatprep.subr.mxu0 0.0
    %97 = vmatpush1.msra.mxu0 0.0
    %98 = vmatprep.subr.mxu0 0.0
    %99 = vmatpush1.msra.mxu0 0.0
    %100 = vmatprep.subr.mxu0 0.0
    %101 = vmatpush1.msra.mxu0 0.0
    %102 = vmatprep.subr.mxu0 0.0
    %103 = vmatpush1.msra.mxu0 0.0
    %104 = vmatprep.subr.mxu0 0.0
    %105 = vmatpush1.msra.mxu0 0.0
    %106 = vmatprep.subr.mxu0 0.0
    %107 = vmatpush1.msra.mxu0 0.0
    %108 = vmatprep.subr.mxu0 0.0
    %109 = vmatpush1.msra.mxu0 0.0
    %110 = vmatprep.subr.mxu0 0.0
    %111 = vmatpush1.msra.mxu0 0.0
    %112 = vmatprep.subr.mxu0 0.0
    %113 = vmatpush1.msra.mxu0 0.0
    %114 = vmatprep.subr.mxu0 0.0
    %115 = vmatpush1.msra.mxu0 0.0
    %116 = vmatprep.subr.mxu0 0.0
    %117 = vmatpush1.msra.mxu0 0.0
    %118 = vmatprep.subr.mxu0 0.0
    %119 = vmatpush1.msra.mxu0 0.0
    %120 = vmatprep.subr.mxu0 0.0
    %121 = vmatpush1.msra.mxu0 0.0
    %122 = vmatprep.subr.mxu0 0.0
    %123 = vmatpush1.msra.mxu0 0.0
    %124 = vmatprep.subr.mxu0 0.0
    %125 = vmatpush1.msra.mxu0 0.0
    %126 = vmatprep.subr.mxu0 0.0
    %127 = vmatpush1.msra.mxu0 0.0
    %128 = vmatprep.subr.mxu0 0.0
    %129 = vmatpush1.msra.mxu0 0.0
    %130 = vmatprep.subr.mxu0 0.0
    %131 = vmatpush1.msra.mxu0 0.0
    %132 = vmatprep.subr.mxu0 0.0
    %133 = vmatpush1.msra.mxu0 0.0
    %134 = vmatprep.subr.mxu0 0.0
    %135 = vmatpush1.msra.mxu0 0.0
    %136 = vmatprep.mubr.f32.mxu0 0.0
    %137 = vmatmul.mubr.f32.gmra.mrb[0].mxu0 %v70
    %v138 = vpop.f32.mrb[0].mxu0
    %v139 = vadd.f32 %v66, %v138
    %v140 = vpop.f32.mrb[0].mxu0
    %141 = vdwg.mxu0
    %142 = vrot.lane.b32.xlu0 %v55, 104
    %v143 = vpop.permute.xlu0 %142
    %vm145 = vcmask 523264
    %v147 = vsel %vm145, %v139, 0
    %149 = vmatprep.subr.mxu0 0.0
    %150 = vmatpush1.msra.mxu0 %v39
    %151 = vmatprep.subr.mxu0 0.0
    %152 = vmatpush1.msra.mxu0 %v40
    %153 = vmatprep.subr.mxu0 0.0
    %154 = vmatpush1.msra.mxu0 %v41
    %155 = vmatprep.subr.mxu0 0.0
    %156 = vmatpush1.msra.mxu0 %v42
    %157 = vmatprep.subr.mxu0 0.0
    %158 = vmatpush1.msra.mxu0 %v43
    %159 = vmatprep.subr.mxu0 0.0
    %160 = vmatpush1.msra.mxu0 %v44
    %161 = vmatprep.subr.mxu0 0.0
    %162 = vmatpush1.msra.mxu0 %v45
    %163 = vmatprep.subr.mxu0 0.0
    %164 = vmatpush1.msra.mxu0 %v46
    %165 = vmatprep.subr.mxu0 0.0
    %166 = vmatpush1.msra.mxu0 0.0
    %167 = vmatprep.subr.mxu0 0.0
    %168 = vmatpush1.msra.mxu0 0.0
    %169 = vmatprep.subr.mxu0 0.0
    %170 = vmatpush1.msra.mxu0 0.0
    %171 = vmatprep.subr.mxu0 0.0
    %172 = vmatpush1.msra.mxu0 0.0
    %173 = vmatprep.subr.mxu0 0.0
    %174 = vmatpush1.msra.mxu0 0.0
    %175 = vmatprep.subr.mxu0 0.0
    %176 = vmatpush1.msra.mxu0 0.0
    %177 = vmatprep.subr.mxu0 0.0
    %178 = vmatpush1.msra.mxu0 0.0
    %179 = vmatprep.subr.mxu0 0.0
    %180 = vmatpush1.msra.mxu0 0.0
    %181 = vmatprep.subr.mxu0 0.0
    %182 = vmatpush1.msra.mxu0 0.0
    %183 = vmatprep.subr.mxu0 0.0
    %184 = vmatpush1.msra.mxu0 0.0
    %185 = vmatprep.subr.mxu0 0.0
    %186 = vmatpush1.msra.mxu0 0.0
    %187 = vmatprep.subr.mxu0 0.0
    %188 = vmatpush1.msra.mxu0 0.0
    %189 = vmatprep.subr.mxu0 0.0
    %190 = vmatpush1.msra.mxu0 0.0
    %191 = vmatprep.subr.mxu0 0.0
    %192 = vmatpush1.msra.mxu0 0.0
    %193 = vmatprep.subr.mxu0 0.0
    %194 = vmatpush1.msra.mxu0 0.0
    %195 = vmatprep.subr.mxu0 0.0
    %196 = vmatpush1.msra.mxu0 0.0
    %197 = vmatprep.subr.mxu0 0.0
    %198 = vmatpush1.msra.mxu0 0.0
    %199 = vmatprep.subr.mxu0 0.0
    %200 = vmatpush1.msra.mxu0 0.0
    %201 = vmatprep.subr.mxu0 0.0
    %202 = vmatpush1.msra.mxu0 0.0
    %203 = vmatprep.subr.mxu0 0.0
    %204 = vmatpush1.msra.mxu0 0.0
    %205 = vmatprep.subr.mxu0 0.0
    %206 = vmatpush1.msra.mxu0 0.0
    %207 = vmatprep.subr.mxu0 0.0
    %208 = vmatpush1.msra.mxu0 0.0
    %209 = vmatprep.subr.mxu0 0.0
    %210 = vmatpush1.msra.mxu0 0.0
    %211 = vmatprep.subr.mxu0 0.0
    %212 = vmatpush1.msra.mxu0 0.0
    %213 = vmatprep.mubr.f32.mxu0 0.0
    %214 = vmatmul.mubr.f32.gmra.mrb[0].mxu0 %v147
    %v215 = vpop.f32.mrb[0].mxu0
    %v216 = vadd.f32 %v143, %v215
    %v217 = vpop.f32.mrb[0].mxu0
    %218 = vdwg.mxu0
    %220 = vrot.lane.b32.xlu0 %v42, 64
    %v221 = vpop.permute.xlu0 %220
    %vm223 = vcmask 64512
    %v225 = vsel %vm223, %v216, 0
    %227 = vmatprep.subr.mxu0 0.0
    %228 = vmatpush1.msra.mxu0 %v221
    %229 = vmatprep.subr.mxu0 0.0
    %230 = vmatpush1.msra.mxu0 0.0
    %231 = vmatprep.subr.mxu0 0.0
    %232 = vmatpush1.msra.mxu0 0.0
    %233 = vmatprep.subr.mxu0 0.0
    %234 = vmatpush1.msra.mxu0 0.0
    %235 = vmatprep.subr.mxu0 0.0
    %236 = vmatpush1.msra.mxu0 0.0
    %237 = vmatprep.subr.mxu0 0.0
    %238 = vmatpush1.msra.mxu0 0.0
    %239 = vmatprep.subr.mxu0 0.0
    %240 = vmatpush1.msra.mxu0 0.0
    %241 = vmatprep.subr.mxu0 0.0
    %242 = vmatpush1.msra.mxu0 0.0
    %243 = vmatprep.subr.mxu0 0.0
    %244 = vmatpush1.msra.mxu0 0.0
    %245 = vmatprep.subr.mxu0 0.0
    %246 = vmatpush1.msra.mxu0 0.0
    %247 = vmatprep.subr.mxu0 0.0
    %248 = vmatpush1.msra.mxu0 0.0
    %249 = vmatprep.subr.mxu0 0.0
    %250 = vmatpush1.msra.mxu0 0.0
    %251 = vmatprep.subr.mxu0 0.0
    %252 = vmatpush1.msra.mxu0 0.0
    %253 = vmatprep.subr.mxu0 0.0
    %254 = vmatpush1.msra.mxu0 0.0
    %255 = vmatprep.subr.mxu0 0.0
    %256 = vmatpush1.msra.mxu0 0.0
    %257 = vmatprep.subr.mxu0 0.0
    %258 = vmatpush1.msra.mxu0 0.0
    %259 = vmatprep.subr.mxu0 0.0
    %260 = vmatpush1.msra.mxu0 0.0
    %261 = vmatprep.subr.mxu0 0.0
    %262 = vmatpush1.msra.mxu0 0.0
    %263 = vmatprep.subr.mxu0 0.0
    %264 = vmatpush1.msra.mxu0 0.0
    %265 = vmatprep.subr.mxu0 0.0
    %266 = vmatpush1.msra.mxu0 0.0
    %267 = vmatprep.subr.mxu0 0.0
    %268 = vmatpush1.msra.mxu0 0.0
    %269 = vmatprep.subr.mxu0 0.0
    %270 = vmatpush1.msra.mxu0 0.0
    %271 = vmatprep.subr.mxu0 0.0
    %272 = vmatpush1.msra.mxu0 0.0
    %273 = vmatprep.subr.mxu0 0.0
    %274 = vmatpush1.msra.mxu0 0.0
    %275 = vmatprep.subr.mxu0 0.0
    %276 = vmatpush1.msra.mxu0 0.0
    %277 = vmatprep.subr.mxu0 0.0
    %278 = vmatpush1.msra.mxu0 0.0
    %279 = vmatprep.subr.mxu0 0.0
    %280 = vmatpush1.msra.mxu0 0.0
    %281 = vmatprep.subr.mxu0 0.0
    %282 = vmatpush1.msra.mxu0 0.0
    %283 = vmatprep.subr.mxu0 0.0
    %284 = vmatpush1.msra.mxu0 0.0
    %285 = vmatprep.subr.mxu0 0.0
    %286 = vmatpush1.msra.mxu0 0.0
    %287 = vmatprep.subr.mxu0 0.0
    %288 = vmatpush1.msra.mxu0 0.0
    %289 = vmatprep.subr.mxu0 0.0
    %290 = vmatpush1.msra.mxu0 0.0
    %291 = vmatprep.mubr.f32.mxu0 0.0
    %292 = vmatmul.mubr.f32.gmra.mrb[0].mxu0 %v225
    %v293 = vpop.f32.mrb[0].mxu0
    %v294 = vadd.f32 0.0, %v293
    %v295 = vpop.f32.mrb[0].mxu0
    %296 = vdwg.mxu0
    %v297 = vmul.f32 %v139, %v294
    %303 = vrot.lane.b32.xlu0 %v39, 120
    %v304 = vpop.permute.xlu0 %303
    %305 = vrot.lane.b32.xlu0 %v40, 120
    %v306 = vpop.permute.xlu0 %305
    %307 = vrot.lane.b32.xlu0 %v41, 120
    %v308 = vpop.permute.xlu0 %307
    %309 = vrot.lane.b32.xlu0 %v42, 120
    %v310 = vpop.permute.xlu0 %309
    %311 = vrot.lane.b32.xlu0 %v43, 120
    %v312 = vpop.permute.xlu0 %311
    %313 = vrot.lane.b32.xlu0 %v44, 120
    %v314 = vpop.permute.xlu0 %313
    %315 = vrot.lane.b32.xlu0 %v45, 120
    %v316 = vpop.permute.xlu0 %315
    %317 = vrot.lane.b32.xlu0 %v46, 120
    %v318 = vpop.permute.xlu0 %317
    %v328 = vsel %vm145, %v297, 0
    %330 = vmatprep.subr.mxu0 0.0
    %331 = vmatpush1.msra.mxu0 %v304
    %332 = vmatprep.subr.mxu0 0.0
    %333 = vmatpush1.msra.mxu0 %v306
    %334 = vmatprep.subr.mxu0 0.0
    %335 = vmatpush1.msra.mxu0 %v308
    %336 = vmatprep.subr.mxu0 0.0
    %337 = vmatpush1.msra.mxu0 %v310
    %338 = vmatprep.subr.mxu0 0.0
    %339 = vmatpush1.msra.mxu0 %v312
    %340 = vmatprep.subr.mxu0 0.0
    %341 = vmatpush1.msra.mxu0 %v314
    %342 = vmatprep.subr.mxu0 0.0
    %343 = vmatpush1.msra.mxu0 %v316
    %344 = vmatprep.subr.mxu0 0.0
    %345 = vmatpush1.msra.mxu0 %v318
    %346 = vmatprep.subr.mxu0 0.0
    %347 = vmatpush1.msra.mxu0 0.0
    %348 = vmatprep.subr.mxu0 0.0
    %349 = vmatpush1.msra.mxu0 0.0
    %350 = vmatprep.subr.mxu0 0.0
    %351 = vmatpush1.msra.mxu0 0.0
    %352 = vmatprep.subr.mxu0 0.0
    %353 = vmatpush1.msra.mxu0 0.0
    %354 = vmatprep.subr.mxu0 0.0
    %355 = vmatpush1.msra.mxu0 0.0
    %356 = vmatprep.subr.mxu0 0.0
    %357 = vmatpush1.msra.mxu0 0.0
    %358 = vmatprep.subr.mxu0 0.0
    %359 = vmatpush1.msra.mxu0 0.0
    %360 = vmatprep.subr.mxu0 0.0
    %361 = vmatpush1.msra.mxu0 0.0
    %362 = vmatprep.subr.mxu0 0.0
    %363 = vmatpush1.msra.mxu0 0.0
    %364 = vmatprep.subr.mxu0 0.0
    %365 = vmatpush1.msra.mxu0 0.0
    %366 = vmatprep.subr.mxu0 0.0
    %367 = vmatpush1.msra.mxu0 0.0
    %368 = vmatprep.subr.mxu0 0.0
    %369 = vmatpush1.msra.mxu0 0.0
    %370 = vmatprep.subr.mxu0 0.0
    %371 = vmatpush1.msra.mxu0 0.0
    %372 = vmatprep.subr.mxu0 0.0
    %373 = vmatpush1.msra.mxu0 0.0
    %374 = vmatprep.subr.mxu0 0.0
    %375 = vmatpush1.msra.mxu0 0.0
    %376 = vmatprep.subr.mxu0 0.0
    %377 = vmatpush1.msra.mxu0 0.0
    %378 = vmatprep.subr.mxu0 0.0
    %379 = vmatpush1.msra.mxu0 0.0
    %380 = vmatprep.subr.mxu0 0.0
    %381 = vmatpush1.msra.mxu0 0.0
    %382 = vmatprep.subr.mxu0 0.0
    %383 = vmatpush1.msra.mxu0 0.0
    %384 = vmatprep.subr.mxu0 0.0
    %385 = vmatpush1.msra.mxu0 0.0
    %386 = vmatprep.subr.mxu0 0.0
    %387 = vmatpush1.msra.mxu0 0.0
    %388 = vmatprep.subr.mxu0 0.0
    %389 = vmatpush1.msra.mxu0 0.0
    %390 = vmatprep.subr.mxu0 0.0
    %391 = vmatpush1.msra.mxu0 0.0
    %392 = vmatprep.subr.mxu0 0.0
    %393 = vmatpush1.msra.mxu0 0.0
    %394 = vmatprep.mubr.f32.mxu0 0.0
    %395 = vmatmul.mubr.f32.gmra.mrb[0].mxu0 %v328
    %v396 = vpop.f32.mrb[0].mxu0
    %v397 = vadd.f32 0.0, %v396
    %v398 = vpop.f32.mrb[0].mxu0
    %399 = vdwg.mxu0
    %v400 = vsel %vm223, %v397, -inf
    %401 = vmax.xlane.f32.xlu0 %v400
    %v402 = vpop.xlane.xlu0 %401
    %v403 = vsub.f32 %v397, %v402
    %v404 = vmul.f32 %v403, 1.442695
    %v405 = vpow.pop %v404
    %v406 = vsel %vm223, %v405, 0.0
    %407 = vadd.xlane.f32.xlu0 %v406
    %v408 = vpop.xlane.xlu0 %407
    %v409 = vrcp.pop %v408
    %v410 = vmul.f32 %v405, %v409
    %411 = vrot.lane.b32.xlu0 %v43, 64
    %v412 = vpop.permute.xlu0 %411
    %v415 = vsel %vm223, %v410, 0
    %417 = vmatprep.subr.mxu0 0.0
    %418 = vmatpush1.msra.mxu0 %v412
    %419 = vmatprep.subr.mxu0 0.0
    %420 = vmatpush1.msra.mxu0 0.0
    %421 = vmatprep.subr.mxu0 0.0
    %422 = vmatpush1.msra.mxu0 0.0
    %423 = vmatprep.subr.mxu0 0.0
    %424 = vmatpush1.msra.mxu0 0.0
    %425 = vmatprep.subr.mxu0 0.0
    %426 = vmatpush1.msra.mxu0 0.0
    %427 = vmatprep.subr.mxu0 0.0
    %428 = vmatpush1.msra.mxu0 0.0
    %429 = vmatprep.subr.mxu0 0.0
    %430 = vmatpush1.msra.mxu0 0.0
    %431 = vmatprep.subr.mxu0 0.0
    %432 = vmatpush1.msra.mxu0 0.0
    %433 = vmatprep.subr.mxu0 0.0
    %434 = vmatpush1.msra.mxu0 0.0
    %435 = vmatprep.subr.mxu0 0.0
    %436 = vmatpush1.msra.mxu0 0.0
    %437 = vmatprep.subr.mxu0 0.0
    %438 = vmatpush1.msra.mxu0 0.0
    %439 = vmatprep.subr.mxu0 0.0
    %440 = vmatpush1.msra.mxu0 0.0
    %441 = vmatprep.subr.mxu0 0.0
    %442 = vmatpush1.msra.mxu0 0.0
    %443 = vmatprep.subr.mxu0 0.0
    %444 = vmatpush1.msra.mxu0 0.0
    %445 = vmatprep.subr.mxu0 0.0
    %446 = vmatpush1.msra.mxu0 0.0
    %447 = vmatprep.subr.mxu0 0.0
    %448 = vmatpush1.msra.mxu0 0.0
    %449 = vmatprep.subr.mxu0 0.0
    %450 = vmatpush1.msra.mxu0 0.0
    %451 = vmatprep.subr.mxu0 0.0
    %452 = vmatpush1.msra.mxu0 0.0
    %453 = vmatprep.subr.mxu0 0.0
    %454 = vmatpush1.msra.mxu0 0.0
    %455 = vmatprep.subr.mxu0 0.0
    %456 = vmatpush1.msra.mxu0 0.0
    %457 = vmatprep.subr.mxu0 0.0
    %458 = vmatpush1.msra.mxu0 0.0
    %459 = vmatprep.subr.mxu0 0.0
    %460 = vmatpush1.msra.mxu0 0.0
    %461 = vmatprep.subr.mxu0 0.0
    %462 = vmatpush1.msra.mxu0 0.0
    %463 = vmatprep.subr.mxu0 0.0
    %464 = vmatpush1.msra.mxu0 0.0
    %465 = vmatprep.subr.mxu0 0.0
    %466 = vmatpush1.msra.mxu0 0.0
    %467 = vmatprep.subr.mxu0 0.0
    %468 = vmatpush1.msra.mxu0 0.0
    %469 = vmatprep.subr.mxu0 0.0
    %470 = vmatpush1.msra.mxu0 0.0
    %471 = vmatprep.subr.mxu0 0.0
    %472 = vmatpush1.msra.mxu0 0.0
    %473 = vmatprep.subr.mxu0 0.0
    %474 = vmatpush1.msra.mxu0 0.0
    %475 = vmatprep.subr.mxu0 0.0
    %476 = vmatpush1.msra.mxu0 0.0
    %477 = vmatprep.subr.mxu0 0.0
    %478 = vmatpush1.msra.mxu0 0.0
    %479 = vmatprep.subr.mxu0 0.0
    %480 = vmatpush1.msra.mxu0 0.0
    %481 = vmatprep.mubr.f32.mxu0 0.0
    %482 = vmatmul.mubr.f32.gmra.mrb[0].mxu0 %v415
    %v483 = vpop.f32.mrb[0].mxu0
    %v484 = vadd.f32 0.0, %v483
    %v485 = vpop.f32.mrb[0].mxu0
    %486 = vdwg.mxu0
    %v487 = vmul.f32 %v484, %v139
    %488 = vrot.lane.b32.xlu0 %v39, 112
    %v489 = vpop.permute.xlu0 %488
    %490 = vrot.lane.b32.xlu0 %v40, 112
    %v491 = vpop.permute.xlu0 %490
    %492 = vrot.lane.b32.xlu0 %v41, 112
    %v493 = vpop.permute.xlu0 %492
    %494 = vrot.lane.b32.xlu0 %v42, 112
    %v495 = vpop.permute.xlu0 %494
    %496 = vrot.lane.b32.xlu0 %v43, 112
    %v497 = vpop.permute.xlu0 %496
    %498 = vrot.lane.b32.xlu0 %v44, 112
    %v499 = vpop.permute.xlu0 %498
    %500 = vrot.lane.b32.xlu0 %v45, 112
    %v501 = vpop.permute.xlu0 %500
    %502 = vrot.lane.b32.xlu0 %v46, 112
    %v503 = vpop.permute.xlu0 %502
    %v513 = vsel %vm145, %v487, 0
    %515 = vmatprep.subr.mxu0 0.0
    %516 = vmatpush1.msra.mxu0 %v489
    %517 = vmatprep.subr.mxu0 0.0
    %518 = vmatpush1.msra.mxu0 %v491
    %519 = vmatprep.subr.mxu0 0.0
    %520 = vmatpush1.msra.mxu0 %v493
    %521 = vmatprep.subr.mxu0 0.0
    %522 = vmatpush1.msra.mxu0 %v495
    %523 = vmatprep.subr.mxu0 0.0
    %524 = vmatpush1.msra.mxu0 %v497
    %525 = vmatprep.subr.mxu0 0.0
    %526 = vmatpush1.msra.mxu0 %v499
    %527 = vmatprep.subr.mxu0 0.0
    %528 = vmatpush1.msra.mxu0 %v501
    %529 = vmatprep.subr.mxu0 0.0
    %530 = vmatpush1.msra.mxu0 %v503
    %531 = vmatprep.subr.mxu0 0.0
    %532 = vmatpush1.msra.mxu0 0.0
    %533 = vmatprep.subr.mxu0 0.0
    %534 = vmatpush1.msra.mxu0 0.0
    %535 = vmatprep.subr.mxu0 0.0
    %536 = vmatpush1.msra.mxu0 0.0
    %537 = vmatprep.subr.mxu0 0.0
    %538 = vmatpush1.msra.mxu0 0.0
    %539 = vmatprep.subr.mxu0 0.0
    %540 = vmatpush1.msra.mxu0 0.0
    %541 = vmatprep.subr.mxu0 0.0
    %542 = vmatpush1.msra.mxu0 0.0
    %543 = vmatprep.subr.mxu0 0.0
    %544 = vmatpush1.msra.mxu0 0.0
    %545 = vmatprep.subr.mxu0 0.0
    %546 = vmatpush1.msra.mxu0 0.0
    %547 = vmatprep.subr.mxu0 0.0
    %548 = vmatpush1.msra.mxu0 0.0
    %549 = vmatprep.subr.mxu0 0.0
    %550 = vmatpush1.msra.mxu0 0.0
    %551 = vmatprep.subr.mxu0 0.0
    %552 = vmatpush1.msra.mxu0 0.0
    %553 = vmatprep.subr.mxu0 0.0
    %554 = vmatpush1.msra.mxu0 0.0
    %555 = vmatprep.subr.mxu0 0.0
    %556 = vmatpush1.msra.mxu0 0.0
    %557 = vmatprep.subr.mxu0 0.0
    %558 = vmatpush1.msra.mxu0 0.0
    %559 = vmatprep.subr.mxu0 0.0
    %560 = vmatpush1.msra.mxu0 0.0
    %561 = vmatprep.subr.mxu0 0.0
    %562 = vmatpush1.msra.mxu0 0.0
    %563 = vmatprep.subr.mxu0 0.0
    %564 = vmatpush1.msra.mxu0 0.0
    %565 = vmatprep.subr.mxu0 0.0
    %566 = vmatpush1.msra.mxu0 0.0
    %567 = vmatprep.subr.mxu0 0.0
    %568 = vmatpush1.msra.mxu0 0.0
    %569 = vmatprep.subr.mxu0 0.0
    %570 = vmatpush1.msra.mxu0 0.0
    %571 = vmatprep.subr.mxu0 0.0
    %572 = vmatpush1.msra.mxu0 0.0
    %573 = vmatprep.subr.mxu0 0.0
    %574 = vmatpush1.msra.mxu0 0.0
    %575 = vmatprep.subr.mxu0 0.0
    %576 = vmatpush1.msra.mxu0 0.0
    %577 = vmatprep.subr.mxu0 0.0
    %578 = vmatpush1.msra.mxu0 0.0
    %579 = vmatprep.mubr.f32.mxu0 0.0
    %580 = vmatmul.mubr.f32.gmra.mrb[0].mxu0 %v513
    %v581 = vpop.f32.mrb[0].mxu0
    %v582 = vadd.f32 0.0, %v581
    %v583 = vpop.f32.mrb[0].mxu0
    %584 = vdwg.mxu0
    %586 = vrot.lane.b32.xlu0 %v582, 8
    %v587 = vpop.permute.xlu0 %586
    %v589 = vsel %vm223, %v216, %v587
    %v590 = vlaneseq
    %v591 = vshrl.u32 %v590, 7
    %v592 = vsub.s32 0, %v591
    %v593 = vrot.slane %v48, %v592
    %594 = vrot.lane.b32.xlu0 %v39, 104
    %v595 = vpop.permute.xlu0 %594
    %596 = vrot.lane.b32.xlu0 %v40, 104
    %v597 = vpop.permute.xlu0 %596
    %601 = vrot.lane.b32.xlu0 %v593, 104
    %v602 = vpop.permute.xlu0 %601
    %v605 = vsel %vm68, %v589, 0
    %607 = vmatprep.subr.mxu0 0.0
    %608 = vmatpush1.msra.mxu0 %v595
    %609 = vmatprep.subr.mxu0 0.0
    %610 = vmatpush1.msra.mxu0 %v597
    %611 = vmatprep.subr.mxu0 0.0
    %612 = vmatpush1.msra.mxu0 0.0
    %613 = vmatprep.subr.mxu0 0.0
    %614 = vmatpush1.msra.mxu0 0.0
    %615 = vmatprep.subr.mxu0 0.0
    %616 = vmatpush1.msra.mxu0 0.0
    %617 = vmatprep.subr.mxu0 0.0
    %618 = vmatpush1.msra.mxu0 0.0
    %619 = vmatprep.subr.mxu0 0.0
    %620 = vmatpush1.msra.mxu0 0.0
    %621 = vmatprep.subr.mxu0 0.0
    %622 = vmatpush1.msra.mxu0 0.0
    %623 = vmatprep.subr.mxu0 0.0
    %624 = vmatpush1.msra.mxu0 0.0
    %625 = vmatprep.subr.mxu0 0.0
    %626 = vmatpush1.msra.mxu0 0.0
    %627 = vmatprep.subr.mxu0 0.0
    %628 = vmatpush1.msra.mxu0 0.0
    %629 = vmatprep.subr.mxu0 0.0
    %630 = vmatpush1.msra.mxu0 0.0
    %631 = vmatprep.subr.mxu0 0.0
    %632 = vmatpush1.msra.mxu0 0.0
    %633 = vmatprep.subr.mxu0 0.0
    %634 = vmatpush1.msra.mxu0 0.0
    %635 = vmatprep.subr.mxu0 0.0
    %636 = vmatpush1.msra.mxu0 0.0
    %637 = vmatprep.subr.mxu0 0.0
    %638 = vmatpush1.msra.mxu0 0.0
    %639 = vmatprep.subr.mxu0 0.0
    %640 = vmatpush1.msra.mxu0 0.0
    %641 = vmatprep.subr.mxu0 0.0
    %642 = vmatpush1.msra.mxu0 0.0
    %643 = vmatprep.subr.mxu0 0.0
    %644 = vmatpush1.msra.mxu0 0.0
    %645 = vmatprep.subr.mxu0 0.0
    %646 = vmatpush1.msra.mxu0 0.0
    %647 = vmatprep.subr.mxu0 0.0
    %648 = vmatpush1.msra.mxu0 0.0
    %649 = vmatprep.subr.mxu0 0.0
    %650 = vmatpush1.msra.mxu0 0.0
    %651 = vmatprep.subr.mxu0 0.0
    %652 = vmatpush1.msra.mxu0 0.0
    %653 = vmatprep.subr.mxu0 0.0
    %654 = vmatpush1.msra.mxu0 0.0
    %655 = vmatprep.subr.mxu0 0.0
    %656 = vmatpush1.msra.mxu0 0.0
    %657 = vmatprep.subr.mxu0 0.0
    %658 = vmatpush1.msra.mxu0 0.0
    %659 = vmatprep.subr.mxu0 0.0
    %660 = vmatpush1.msra.mxu0 0.0
    %661 = vmatprep.subr.mxu0 0.0
    %662 = vmatpush1.msra.mxu0 0.0
    %663 = vmatprep.subr.mxu0 0.0
    %664 = vmatpush1.msra.mxu0 0.0
    %665 = vmatprep.subr.mxu0 0.0
    %666 = vmatpush1.msra.mxu0 0.0
    %667 = vmatprep.subr.mxu0 0.0
    %668 = vmatpush1.msra.mxu0 0.0
    %669 = vmatprep.subr.mxu0 0.0
    %670 = vmatpush1.msra.mxu0 0.0
    %671 = vmatprep.mubr.f32.mxu0 0.0
    %672 = vmatmul.mubr.f32.gmra.mrb[0].mxu0 %v605
    %v673 = vpop.f32.mrb[0].mxu0
    %v674 = vadd.f32 %v602, %v673
    %v675 = vpop.f32.mrb[0].mxu0
    %676 = vdwg.mxu0
    %v677 = vtanh.pop %v674
    %679 = vrot.lane.b32.xlu0 %v397, 8
    %v680 = vpop.permute.xlu0 %679
    %v682 = vsel %vm223, %v677, %v680
    %v683 = vlaneseq
    %v684 = vshrl.u32 %v683, 7
    %v685 = vsub.s32 0, %v684
    %v686 = vrot.slane %v51, %v685
    %v688 = vsel %vm68, %v682, 0
    %690 = vmatprep.subr.mxu0 0.0
    %691 = vmatpush1.msra.mxu0 %v49
    %692 = vmatprep.subr.mxu0 0.0
    %693 = vmatpush1.msra.mxu0 %v50
    %694 = vmatprep.subr.mxu0 0.0
    %695 = vmatpush1.msra.mxu0 0.0
    %696 = vmatprep.subr.mxu0 0.0
    %697 = vmatpush1.msra.mxu0 0.0
    %698 = vmatprep.subr.mxu0 0.0
    %699 = vmatpush1.msra.mxu0 0.0
    %700 = vmatprep.subr.mxu0 0.0
    %701 = vmatpush1.msra.mxu0 0.0
    %702 = vmatprep.subr.mxu0 0.0
    %703 = vmatpush1.msra.mxu0 0.0
    %704 = vmatprep.subr.mxu0 0.0
    %705 = vmatpush1.msra.mxu0 0.0
    %706 = vmatprep.subr.mxu0 0.0
    %707 = vmatpush1.msra.mxu0 0.0
    %708 = vmatprep.subr.mxu0 0.0
    %709 = vmatpush1.msra.mxu0 0.0
    %710 = vmatprep.subr.mxu0 0.0
    %711 = vmatpush1.msra.mxu0 0.0
    %712 = vmatprep.subr.mxu0 0.0
    %713 = vmatpush1.msra.mxu0 0.0
    %714 = vmatprep.subr.mxu0 0.0
    %715 = vmatpush1.msra.mxu0 0.0
    %716 = vmatprep.subr.mxu0 0.0
    %717 = vmatpush1.msra.mxu0 0.0
    %718 = vmatprep.subr.mxu0 0.0
    %719 = vmatpush1.msra.mxu0 0.0
    %720 = vmatprep.subr.mxu0 0.0
    %721 = vmatpush1.msra.mxu0 0.0
    %722 = vmatprep.subr.mxu0 0.0
    %723 = vmatpush1.msra.mxu0 0.0
    %724 = vmatprep.subr.mxu0 0.0
    %725 = vmatpush1.msra.mxu0 0.0
    %726 = vmatprep.subr.mxu0 0.0
    %727 = vmatpush1.msra.mxu0 0.0
    %728 = vmatprep.subr.mxu0 0.0
    %729 = vmatpush1.msra.mxu0 0.0
    %730 = vmatprep.subr.mxu0 0.0
    %731 = vmatpush1.msra.mxu0 0.0
    %732 = vmatprep.subr.mxu0 0.0
    %733 = vmatpush1.msra.mxu0 0.0
    %734 = vmatprep.subr.mxu0 0.0
    %735 = vmatpush1.msra.mxu0 0.0
    %736 = vmatprep.subr.mxu0 0.0
    %737 = vmatpush1.msra.mxu0 0.0
    %738 = vmatprep.subr.mxu0 0.0
    %739 = vmatpush1.msra.mxu0 0.0
    %740 = vmatprep.subr.mxu0 0.0
    %741 = vmatpush1.msra.mxu0 0.0
    %742 = vmatprep.subr.mxu0 0.0
    %743 = vmatpush1.msra.mxu0 0.0
    %744 = vmatprep.subr.mxu0 0.0
    %745 = vmatpush1.msra.mxu0 0.0
    %746 = vmatprep.subr.mxu0 0.0
    %747 = vmatpush1.msra.mxu0 0.0
    %748 = vmatprep.subr.mxu0 0.0
    %749 = vmatpush1.msra.mxu0 0.0
    %750 = vmatprep.subr.mxu0 0.0
    %751 = vmatpush1.msra.mxu0 0.0
    %752 = vmatprep.subr.mxu0 0.0
    %753 = vmatpush1.msra.mxu0 0.0
    %754 = vmatprep.mubr.f32.mxu0 0.0
    %755 = vmatmul.mubr.f32.gmra.mrb[0].mxu0 %v688
    %v756 = vpop.f32.mrb[0].mxu0
    %v757 = vadd.f32 %v686, %v756
    %v758 = vpop.f32.mrb[0].mxu0
    %759 = vdwg.mxu0
    %760 = vst [vmem:[#allocation7] sm:$0xff] %v757
    // Predicated region
    $region18: #{tpu_custom_call.1} parent=1 // pred_check
      _
    $region19: #{tpu_custom_call.1} parent=1 // pred_check_branch
      %762 = sbr.rel (0) target = $region21
    $region20: #{tpu_custom_call.1} parent=1 // pred_region
      %s764 = ssub.s32 128, 128
      %765 = vsyncadd [#allocation4], %s764
      %s767 = sshll.u32 [#allocation7], 4
      %s768 = int_to_ptr.vmem [resolvable:$true] %s767
      %770 = dma.vmem_to_hbm [thread:$0]  %s768, 128, %s2, [#allocation4]
    $region21: #{tpu_custom_call.1} parent=1 // pred_fallthru
      _
    // Predicated region
    $region22: #{tpu_custom_call.1} parent=1 // pred_check
      _
    $region23: #{tpu_custom_call.1} parent=1 // pred_check_branch
      %772 = sbr.rel (0) target = $region25
    $region24: #{tpu_custom_call.1} parent=1 // pred_region
      %773 = dma.done [#allocation4], 128
    $region25: #{tpu_custom_call.1} parent=1 // pred_fallthru
      _
    %774 = vsyncpa [#allocation3], 1
    %775 = vsyncpa [#allocation6], 1
    %776 = vsyncpa [#allocation4], 1

// kernel: tpu_custom_call.1
$region0: #{tpu_custom_call.1}
  #allocation0 [shape = 'u32[]', space=smem, size = 0x4, offset = 0x4, fixed_abs, tag = 'smem constant byte address 0x4 - core index']
  #allocation1 [shape = 'u32[144,128]{1,0:T(1,128)}', space=vmem, size = 0x12000, scoped, tag = 'internal scratch']
  %s0 = inlined_call_operand.hbm [shape: f32[8,16], index: 0, kind: input, shape index: {}]
  %s1 = inlined_call_operand.hbm [shape: f32[88,128], index: 1, kind: input, shape index: {}]
  %s2 = inlined_call_operand.hbm [shape: f32[8,128], index: 2, kind: output, shape index: {}]
  %s3 = sld [smem:[#allocation0]]
  $region26: #{tpu_custom_call.1} parent=0
    _
  %s5 = ssub.s32 1, %s3
  %s6 = scalar_select 0, %s5, %s3
  $region1: #{tpu_custom_call.1} parent=0
    #allocation2 [shape = 'u8[4096]{0}', space=vmem, size = 0x1000, scoped, tag = 'input window, operand 0, single buffered']
    #allocation3 [shape = 's32[1]{0}', space=sflag, size = 0x4, scoped, tag = 'scoped memory for tpu_custom_call.1']
    #allocation4 [shape = 's32[1]{0}', space=sflag, size = 0x4, scoped, tag = 'scoped memory for tpu_custom_call.1']
    #allocation5 [shape = 'u8[45056]{0}', space=vmem, size = 0xb000, scoped, tag = 'input window, operand 1, single buffered']
    #allocation6 [shape = 's32[1]{0}', space=sflag, size = 0x4, scoped, tag = 'scoped memory for tpu_custom_call.1']
    #allocation7 [shape = 'u8[4096]{0}', space=vmem, size = 0x1000, scoped, tag = 'output window, operand 0, single buffered']
    %7 = vsyncpa [#allocation3], 0
    %8 = vsyncpa [#allocation6], 0
    %9 = vsyncpa [#allocation4], 0
    // Predicated region
    $region2: #{tpu_custom_call.1} parent=1 // pred_check
      _
    $region3: #{tpu_custom_call.1} parent=1 // pred_check_branch
      %11 = sbr.rel (0) target = $region5
    $region4: #{tpu_custom_call.1} parent=1 // pred_region
      %s13 = ssub.s32 128, 128
      %14 = vsyncadd [#allocation3], %s13
      %s16 = sshll.u32 [#allocation2], 4
      %s17 = int_to_ptr.vmem [resolvable:$true] %s16
      %19 = dma.hbm_to_vmem [thread:$0]  %s0, 128, %s17, [#allocation3]
    $region5: #{tpu_custom_call.1} parent=1 // pred_fallthru
      _
    // Predicated region
    $region6: #{tpu_custom_call.1} parent=1 // pred_check
      _
    $region7: #{tpu_custom_call.1} parent=1 // pred_check_branch
      %21 = sbr.rel (0) target = $region9
    $region8: #{tpu_custom_call.1} parent=1 // pred_region
      %s23 = ssub.s32 1408, 1408
      %24 = vsyncadd [#allocation6], %s23
      %s25 = sshll.u32 [#allocation5], 4
      %s26 = int_to_ptr.vmem [resolvable:$true] %s25
      %31 = dma.hbm_to_vmem [thread:$0]  %s1, 1408, %s26, [#allocation6], 128, 128, 8
    $region9: #{tpu_custom_call.1} parent=1 // pred_fallthru
      _
    // Predicated region
    $region10: #{tpu_custom_call.1} parent=1 // pred_check
      _
    $region11: #{tpu_custom_call.1} parent=1 // pred_check_branch
      %33 = sbr.rel (0) target = $region13
    $region12: #{tpu_custom_call.1} parent=1 // pred_region
      %34 = dma.done [#allocation3], 128
    $region13: #{tpu_custom_call.1} parent=1 // pred_fallthru
      _
    // Predicated region
    $region14: #{tpu_custom_call.1} parent=1 // pred_check
      _
    $region15: #{tpu_custom_call.1} parent=1 // pred_check_branch
      %36 = sbr.rel (0) target = $region17
    $region16: #{tpu_custom_call.1} parent=1 // pred_region
      %37 = dma.done [#allocation6], 1408
    $region17: #{tpu_custom_call.1} parent=1 // pred_fallthru
      _
    %v38 = vld [vmem:[#allocation2] sm:$0xff]
    %v39 = vld [vmem:[#allocation5] sm:$0xff]
    %v40 = vld [vmem:[#allocation5 + $0x8] sm:$0xff]
    %v41 = vld [vmem:[#allocation5 + $0x10] sm:$0xff]
    %v42 = vld [vmem:[#allocation5 + $0x18] sm:$0xff]
    %v43 = vld [vmem:[#allocation5 + $0x20] sm:$0xff]
    %v44 = vld [vmem:[#allocation5 + $0x28] sm:$0xff]
    %v45 = vld [vmem:[#allocation5 + $0x30] sm:$0xff]
    %v46 = vld [vmem:[#allocation5 + $0x38] sm:$0xff]
    %v47 = vld [vmem:[#allocation5 + $0x10] sm:$0x1]
    %v48 = vld [vmem:[#allocation5 + $0x11] sm:$0x1]
    %v49 = vld [vmem:[#allocation5 + $0x40] sm:$0xff]
    %v50 = vld [vmem:[#allocation5 + $0x48] sm:$0xff]
    %v51 = vld [vmem:[#allocation5 + $0x50] sm:$0x1]
    %v52 = vlaneseq
    %v53 = vshrl.u32 %v52, 7
    %v54 = vsub.s32 0, %v53
    %v55 = vrot.slane %v47, %v54
    %58 = vrot.lane.b32.xlu0 %v39, 64
    %v59 = vpop.permute.xlu0 %58
    %60 = vrot.lane.b32.xlu0 %v40, 64
    %v61 = vpop.permute.xlu0 %60
    %65 = vrot.lane.b32.xlu0 %v55, 64
    %v66 = vpop.permute.xlu0 %65
    %vm68 = vcmask 130048
    %v70 = vsel %vm68, %v38, 0
    %72 = vmatprep.subr.mxu0 0.0
    %73 = vmatpush1.msra.mxu0 %v59
    %74 = vmatprep.subr.mxu0 0.0
    %75 = vmatpush1.msra.mxu0 %v61
    %76 = vmatprep.subr.mxu0 0.0
    %77 = vmatpush1.msra.mxu0 0.0
    %78 = vmatprep.subr.mxu0 0.0
    %79 = vmatpush1.msra.mxu0 0.0
    %80 = vmatprep.subr.mxu0 0.0
    %81 = vmatpush1.msra.mxu0 0.0
    %82 = vmatprep.subr.mxu0 0.0
    %83 = vmatpush1.msra.mxu0 0.0
    %84 = vmatprep.subr.mxu0 0.0
    %85 = vmatpush1.msra.mxu0 0.0
    %86 = vmatprep.subr.mxu0 0.0
    %87 = vmatpush1.msra.mxu0 0.0
    %88 = vmatprep.subr.mxu0 0.0
    %89 = vmatpush1.msra.mxu0 0.0
    %90 = vmatprep.subr.mxu0 0.0
    %91 = vmatpush1.msra.mxu0 0.0
    %92 = vmatprep.subr.mxu0 0.0
    %93 = vmatpush1.msra.mxu0 0.0
    %94 = vmatprep.subr.mxu0 0.0
    %95 = vmatpush1.msra.mxu0 0.0
    %96 = vmatprep.subr.mxu0 0.0
    %97 = vmatpush1.msra.mxu0 0.0
    %98 = vmatprep.subr.mxu0 0.0
    %99 = vmatpush1.msra.mxu0 0.0
    %100 = vmatprep.subr.mxu0 0.0
    %101 = vmatpush1.msra.mxu0 0.0
    %102 = vmatprep.subr.mxu0 0.0
    %103 = vmatpush1.msra.mxu0 0.0
    %104 = vmatprep.subr.mxu0 0.0
    %105 = vmatpush1.msra.mxu0 0.0
    %106 = vmatprep.subr.mxu0 0.0
    %107 = vmatpush1.msra.mxu0 0.0
    %108 = vmatprep.subr.mxu0 0.0
    %109 = vmatpush1.msra.mxu0 0.0
    %110 = vmatprep.subr.mxu0 0.0
    %111 = vmatpush1.msra.mxu0 0.0
    %112 = vmatprep.subr.mxu0 0.0
    %113 = vmatpush1.msra.mxu0 0.0
    %114 = vmatprep.subr.mxu0 0.0
    %115 = vmatpush1.msra.mxu0 0.0
    %116 = vmatprep.subr.mxu0 0.0
    %117 = vmatpush1.msra.mxu0 0.0
    %118 = vmatprep.subr.mxu0 0.0
    %119 = vmatpush1.msra.mxu0 0.0
    %120 = vmatprep.subr.mxu0 0.0
    %121 = vmatpush1.msra.mxu0 0.0
    %122 = vmatprep.subr.mxu0 0.0
    %123 = vmatpush1.msra.mxu0 0.0
    %124 = vmatprep.subr.mxu0 0.0
    %125 = vmatpush1.msra.mxu0 0.0
    %126 = vmatprep.subr.mxu0 0.0
    %127 = vmatpush1.msra.mxu0 0.0
    %128 = vmatprep.subr.mxu0 0.0
    %129 = vmatpush1.msra.mxu0 0.0
    %130 = vmatprep.subr.mxu0 0.0
    %131 = vmatpush1.msra.mxu0 0.0
    %132 = vmatprep.subr.mxu0 0.0
    %133 = vmatpush1.msra.mxu0 0.0
    %134 = vmatprep.subr.mxu0 0.0
    %135 = vmatpush1.msra.mxu0 0.0
    %136 = vmatprep.mubr.f32.mxu0 0.0
    %137 = vmatmul.mubr.f32.gmra.mrb[0].mxu0 %v70
    %v138 = vpop.f32.mrb[0].mxu0
    %v139 = vadd.f32 %v66, %v138
    %v140 = vpop.f32.mrb[0].mxu0
    %141 = vdwg.mxu0
    %142 = vrot.lane.b32.xlu0 %v55, 104
    %v143 = vpop.permute.xlu0 %142
    %vm145 = vcmask 523264
    %v147 = vsel %vm145, %v139, 0
    %149 = vmatprep.subr.mxu0 0.0
    %150 = vmatpush1.msra.mxu0 %v39
    %151 = vmatprep.subr.mxu0 0.0
    %152 = vmatpush1.msra.mxu0 %v40
    %153 = vmatprep.subr.mxu0 0.0
    %154 = vmatpush1.msra.mxu0 %v41
    %155 = vmatprep.subr.mxu0 0.0
    %156 = vmatpush1.msra.mxu0 %v42
    %157 = vmatprep.subr.mxu0 0.0
    %158 = vmatpush1.msra.mxu0 %v43
    %159 = vmatprep.subr.mxu0 0.0
    %160 = vmatpush1.msra.mxu0 %v44
    %161 = vmatprep.subr.mxu0 0.0
    %162 = vmatpush1.msra.mxu0 %v45
    %163 = vmatprep.subr.mxu0 0.0
    %164 = vmatpush1.msra.mxu0 %v46
    %165 = vmatprep.subr.mxu0 0.0
    %166 = vmatpush1.msra.mxu0 0.0
    %167 = vmatprep.subr.mxu0 0.0
    %168 = vmatpush1.msra.mxu0 0.0
    %169 = vmatprep.subr.mxu0 0.0
    %170 = vmatpush1.msra.mxu0 0.0
    %171 = vmatprep.subr.mxu0 0.0
    %172 = vmatpush1.msra.mxu0 0.0
    %173 = vmatprep.subr.mxu0 0.0
    %174 = vmatpush1.msra.mxu0 0.0
    %175 = vmatprep.subr.mxu0 0.0
    %176 = vmatpush1.msra.mxu0 0.0
    %177 = vmatprep.subr.mxu0 0.0
    %178 = vmatpush1.msra.mxu0 0.0
    %179 = vmatprep.subr.mxu0 0.0
    %180 = vmatpush1.msra.mxu0 0.0
    %181 = vmatprep.subr.mxu0 0.0
    %182 = vmatpush1.msra.mxu0 0.0
    %183 = vmatprep.subr.mxu0 0.0
    %184 = vmatpush1.msra.mxu0 0.0
    %185 = vmatprep.subr.mxu0 0.0
    %186 = vmatpush1.msra.mxu0 0.0
    %187 = vmatprep.subr.mxu0 0.0
    %188 = vmatpush1.msra.mxu0 0.0
    %189 = vmatprep.subr.mxu0 0.0
    %190 = vmatpush1.msra.mxu0 0.0
    %191 = vmatprep.subr.mxu0 0.0
    %192 = vmatpush1.msra.mxu0 0.0
    %193 = vmatprep.subr.mxu0 0.0
    %194 = vmatpush1.msra.mxu0 0.0
    %195 = vmatprep.subr.mxu0 0.0
    %196 = vmatpush1.msra.mxu0 0.0
    %197 = vmatprep.subr.mxu0 0.0
    %198 = vmatpush1.msra.mxu0 0.0
    %199 = vmatprep.subr.mxu0 0.0
    %200 = vmatpush1.msra.mxu0 0.0
    %201 = vmatprep.subr.mxu0 0.0
    %202 = vmatpush1.msra.mxu0 0.0
    %203 = vmatprep.subr.mxu0 0.0
    %204 = vmatpush1.msra.mxu0 0.0
    %205 = vmatprep.subr.mxu0 0.0
    %206 = vmatpush1.msra.mxu0 0.0
    %207 = vmatprep.subr.mxu0 0.0
    %208 = vmatpush1.msra.mxu0 0.0
    %209 = vmatprep.subr.mxu0 0.0
    %210 = vmatpush1.msra.mxu0 0.0
    %211 = vmatprep.subr.mxu0 0.0
    %212 = vmatpush1.msra.mxu0 0.0
    %213 = vmatprep.mubr.f32.mxu0 0.0
    %214 = vmatmul.mubr.f32.gmra.mrb[0].mxu0 %v147
    %v215 = vpop.f32.mrb[0].mxu0
    %v216 = vadd.f32 %v143, %v215
    %v217 = vpop.f32.mrb[0].mxu0
    %218 = vdwg.mxu0
    %220 = vrot.lane.b32.xlu0 %v42, 64
    %v221 = vpop.permute.xlu0 %220
    %vm223 = vcmask 64512
    %v225 = vsel %vm223, %v216, 0
    %227 = vmatprep.subr.mxu0 0.0
    %228 = vmatpush1.msra.mxu0 %v221
    %229 = vmatprep.subr.mxu0 0.0
    %230 = vmatpush1.msra.mxu0 0.0
    %231 = vmatprep.subr.mxu0 0.0
    %232 = vmatpush1.msra.mxu0 0.0
    %233 = vmatprep.subr.mxu0 0.0
    %234 = vmatpush1.msra.mxu0 0.0
    %235 = vmatprep.subr.mxu0 0.0
    %236 = vmatpush1.msra.mxu0 0.0
    %237 = vmatprep.subr.mxu0 0.0
    %238 = vmatpush1.msra.mxu0 0.0
    %239 = vmatprep.subr.mxu0 0.0
    %240 = vmatpush1.msra.mxu0 0.0
    %241 = vmatprep.subr.mxu0 0.0
    %242 = vmatpush1.msra.mxu0 0.0
    %243 = vmatprep.subr.mxu0 0.0
    %244 = vmatpush1.msra.mxu0 0.0
    %245 = vmatprep.subr.mxu0 0.0
    %246 = vmatpush1.msra.mxu0 0.0
    %247 = vmatprep.subr.mxu0 0.0
    %248 = vmatpush1.msra.mxu0 0.0
    %249 = vmatprep.subr.mxu0 0.0
    %250 = vmatpush1.msra.mxu0 0.0
    %251 = vmatprep.subr.mxu0 0.0
    %252 = vmatpush1.msra.mxu0 0.0
    %253 = vmatprep.subr.mxu0 0.0
    %254 = vmatpush1.msra.mxu0 0.0
    %255 = vmatprep.subr.mxu0 0.0
    %256 = vmatpush1.msra.mxu0 0.0
    %257 = vmatprep.subr.mxu0 0.0
    %258 = vmatpush1.msra.mxu0 0.0
    %259 = vmatprep.subr.mxu0 0.0
    %260 = vmatpush1.msra.mxu0 0.0
    %261 = vmatprep.subr.mxu0 0.0
    %262 = vmatpush1.msra.mxu0 0.0
    %263 = vmatprep.subr.mxu0 0.0
    %264 = vmatpush1.msra.mxu0 0.0
    %265 = vmatprep.subr.mxu0 0.0
    %266 = vmatpush1.msra.mxu0 0.0
    %267 = vmatprep.subr.mxu0 0.0
    %268 = vmatpush1.msra.mxu0 0.0
    %269 = vmatprep.subr.mxu0 0.0
    %270 = vmatpush1.msra.mxu0 0.0
    %271 = vmatprep.subr.mxu0 0.0
    %272 = vmatpush1.msra.mxu0 0.0
    %273 = vmatprep.subr.mxu0 0.0
    %274 = vmatpush1.msra.mxu0 0.0
    %275 = vmatprep.subr.mxu0 0.0
    %276 = vmatpush1.msra.mxu0 0.0
    %277 = vmatprep.subr.mxu0 0.0
    %278 = vmatpush1.msra.mxu0 0.0
    %279 = vmatprep.subr.mxu0 0.0
    %280 = vmatpush1.msra.mxu0 0.0
    %281 = vmatprep.subr.mxu0 0.0
    %282 = vmatpush1.msra.mxu0 0.0
    %283 = vmatprep.subr.mxu0 0.0
    %284 = vmatpush1.msra.mxu0 0.0
    %285 = vmatprep.subr.mxu0 0.0
    %286 = vmatpush1.msra.mxu0 0.0
    %287 = vmatprep.subr.mxu0 0.0
    %288 = vmatpush1.msra.mxu0 0.0
    %289 = vmatprep.subr.mxu0 0.0
    %290 = vmatpush1.msra.mxu0 0.0
    %291 = vmatprep.mubr.f32.mxu0 0.0
    %292 = vmatmul.mubr.f32.gmra.mrb[0].mxu0 %v225
    %v293 = vpop.f32.mrb[0].mxu0
    %v294 = vadd.f32 0.0, %v293
    %v295 = vpop.f32.mrb[0].mxu0
    %296 = vdwg.mxu0
    %v297 = vmul.f32 %v139, %v294
    %303 = vrot.lane.b32.xlu0 %v39, 120
    %v304 = vpop.permute.xlu0 %303
    %305 = vrot.lane.b32.xlu0 %v40, 120
    %v306 = vpop.permute.xlu0 %305
    %307 = vrot.lane.b32.xlu0 %v41, 120
    %v308 = vpop.permute.xlu0 %307
    %309 = vrot.lane.b32.xlu0 %v42, 120
    %v310 = vpop.permute.xlu0 %309
    %311 = vrot.lane.b32.xlu0 %v43, 120
    %v312 = vpop.permute.xlu0 %311
    %313 = vrot.lane.b32.xlu0 %v44, 120
    %v314 = vpop.permute.xlu0 %313
    %315 = vrot.lane.b32.xlu0 %v45, 120
    %v316 = vpop.permute.xlu0 %315
    %317 = vrot.lane.b32.xlu0 %v46, 120
    %v318 = vpop.permute.xlu0 %317
    %v328 = vsel %vm145, %v297, 0
    %330 = vmatprep.subr.mxu0 0.0
    %331 = vmatpush1.msra.mxu0 %v304
    %332 = vmatprep.subr.mxu0 0.0
    %333 = vmatpush1.msra.mxu0 %v306
    %334 = vmatprep.subr.mxu0 0.0
    %335 = vmatpush1.msra.mxu0 %v308
    %336 = vmatprep.subr.mxu0 0.0
    %337 = vmatpush1.msra.mxu0 %v310
    %338 = vmatprep.subr.mxu0 0.0
    %339 = vmatpush1.msra.mxu0 %v312
    %340 = vmatprep.subr.mxu0 0.0
    %341 = vmatpush1.msra.mxu0 %v314
    %342 = vmatprep.subr.mxu0 0.0
    %343 = vmatpush1.msra.mxu0 %v316
    %344 = vmatprep.subr.mxu0 0.0
    %345 = vmatpush1.msra.mxu0 %v318
    %346 = vmatprep.subr.mxu0 0.0
    %347 = vmatpush1.msra.mxu0 0.0
    %348 = vmatprep.subr.mxu0 0.0
    %349 = vmatpush1.msra.mxu0 0.0
    %350 = vmatprep.subr.mxu0 0.0
    %351 = vmatpush1.msra.mxu0 0.0
    %352 = vmatprep.subr.mxu0 0.0
    %353 = vmatpush1.msra.mxu0 0.0
    %354 = vmatprep.subr.mxu0 0.0
    %355 = vmatpush1.msra.mxu0 0.0
    %356 = vmatprep.subr.mxu0 0.0
    %357 = vmatpush1.msra.mxu0 0.0
    %358 = vmatprep.subr.mxu0 0.0
    %359 = vmatpush1.msra.mxu0 0.0
    %360 = vmatprep.subr.mxu0 0.0
    %361 = vmatpush1.msra.mxu0 0.0
    %362 = vmatprep.subr.mxu0 0.0
    %363 = vmatpush1.msra.mxu0 0.0
    %364 = vmatprep.subr.mxu0 0.0
    %365 = vmatpush1.msra.mxu0 0.0
    %366 = vmatprep.subr.mxu0 0.0
    %367 = vmatpush1.msra.mxu0 0.0
    %368 = vmatprep.subr.mxu0 0.0
    %369 = vmatpush1.msra.mxu0 0.0
    %370 = vmatprep.subr.mxu0 0.0
    %371 = vmatpush1.msra.mxu0 0.0
    %372 = vmatprep.subr.mxu0 0.0
    %373 = vmatpush1.msra.mxu0 0.0
    %374 = vmatprep.subr.mxu0 0.0
    %375 = vmatpush1.msra.mxu0 0.0
    %376 = vmatprep.subr.mxu0 0.0
    %377 = vmatpush1.msra.mxu0 0.0
    %378 = vmatprep.subr.mxu0 0.0
    %379 = vmatpush1.msra.mxu0 0.0
    %380 = vmatprep.subr.mxu0 0.0
    %381 = vmatpush1.msra.mxu0 0.0
    %382 = vmatprep.subr.mxu0 0.0
    %383 = vmatpush1.msra.mxu0 0.0
    %384 = vmatprep.subr.mxu0 0.0
    %385 = vmatpush1.msra.mxu0 0.0
    %386 = vmatprep.subr.mxu0 0.0
    %387 = vmatpush1.msra.mxu0 0.0
    %388 = vmatprep.subr.mxu0 0.0
    %389 = vmatpush1.msra.mxu0 0.0
    %390 = vmatprep.subr.mxu0 0.0
    %391 = vmatpush1.msra.mxu0 0.0
    %392 = vmatprep.subr.mxu0 0.0
    %393 = vmatpush1.msra.mxu0 0.0
    %394 = vmatprep.mubr.f32.mxu0 0.0
    %395 = vmatmul.mubr.f32.gmra.mrb[0].mxu0 %v328
    %v396 = vpop.f32.mrb[0].mxu0
    %v397 = vadd.f32 0.0, %v396
    %v398 = vpop.f32.mrb[0].mxu0
    %399 = vdwg.mxu0
    %v400 = vsel %vm223, %v397, -inf
    %401 = vmax.xlane.f32.xlu0 %v400
    %v402 = vpop.xlane.xlu0 %401
    %v403 = vsub.f32 %v397, %v402
    %v404 = vmul.f32 %v403, 1.442695
    %v405 = vpow.pop %v404
    %v406 = vsel %vm223, %v405, 0.0
    %407 = vadd.xlane.f32.xlu0 %v406
    %v408 = vpop.xlane.xlu0 %407
    %v409 = vrcp.pop %v408
    %v410 = vmul.f32 %v405, %v409
    %411 = vrot.lane.b32.xlu0 %v43, 64
    %v412 = vpop.permute.xlu0 %411
    %v415 = vsel %vm223, %v410, 0
    %417 = vmatprep.subr.mxu0 0.0
    %418 = vmatpush1.msra.mxu0 %v412
    %419 = vmatprep.subr.mxu0 0.0
    %420 = vmatpush1.msra.mxu0 0.0
    %421 = vmatprep.subr.mxu0 0.0
    %422 = vmatpush1.msra.mxu0 0.0
    %423 = vmatprep.subr.mxu0 0.0
    %424 = vmatpush1.msra.mxu0 0.0
    %425 = vmatprep.subr.mxu0 0.0
    %426 = vmatpush1.msra.mxu0 0.0
    %427 = vmatprep.subr.mxu0 0.0
    %428 = vmatpush1.msra.mxu0 0.0
    %429 = vmatprep.subr.mxu0 0.0
    %430 = vmatpush1.msra.mxu0 0.0
    %431 = vmatprep.subr.mxu0 0.0
    %432 = vmatpush1.msra.mxu0 0.0
    %433 = vmatprep.subr.mxu0 0.0
    %434 = vmatpush1.msra.mxu0 0.0
    %435 = vmatprep.subr.mxu0 0.0
    %436 = vmatpush1.msra.mxu0 0.0
    %437 = vmatprep.subr.mxu0 0.0
    %438 = vmatpush1.msra.mxu0 0.0
    %439 = vmatprep.subr.mxu0 0.0
    %440 = vmatpush1.msra.mxu0 0.0
    %441 = vmatprep.subr.mxu0 0.0
    %442 = vmatpush1.msra.mxu0 0.0
    %443 = vmatprep.subr.mxu0 0.0
    %444 = vmatpush1.msra.mxu0 0.0
    %445 = vmatprep.subr.mxu0 0.0
    %446 = vmatpush1.msra.mxu0 0.0
    %447 = vmatprep.subr.mxu0 0.0
    %448 = vmatpush1.msra.mxu0 0.0
    %449 = vmatprep.subr.mxu0 0.0
    %450 = vmatpush1.msra.mxu0 0.0
    %451 = vmatprep.subr.mxu0 0.0
    %452 = vmatpush1.msra.mxu0 0.0
    %453 = vmatprep.subr.mxu0 0.0
    %454 = vmatpush1.msra.mxu0 0.0
    %455 = vmatprep.subr.mxu0 0.0
    %456 = vmatpush1.msra.mxu0 0.0
    %457 = vmatprep.subr.mxu0 0.0
    %458 = vmatpush1.msra.mxu0 0.0
    %459 = vmatprep.subr.mxu0 0.0
    %460 = vmatpush1.msra.mxu0 0.0
    %461 = vmatprep.subr.mxu0 0.0
    %462 = vmatpush1.msra.mxu0 0.0
    %463 = vmatprep.subr.mxu0 0.0
    %464 = vmatpush1.msra.mxu0 0.0
    %465 = vmatprep.subr.mxu0 0.0
    %466 = vmatpush1.msra.mxu0 0.0
    %467 = vmatprep.subr.mxu0 0.0
    %468 = vmatpush1.msra.mxu0 0.0
    %469 = vmatprep.subr.mxu0 0.0
    %470 = vmatpush1.msra.mxu0 0.0
    %471 = vmatprep.subr.mxu0 0.0
    %472 = vmatpush1.msra.mxu0 0.0
    %473 = vmatprep.subr.mxu0 0.0
    %474 = vmatpush1.msra.mxu0 0.0
    %475 = vmatprep.subr.mxu0 0.0
    %476 = vmatpush1.msra.mxu0 0.0
    %477 = vmatprep.subr.mxu0 0.0
    %478 = vmatpush1.msra.mxu0 0.0
    %479 = vmatprep.subr.mxu0 0.0
    %480 = vmatpush1.msra.mxu0 0.0
    %481 = vmatprep.mubr.f32.mxu0 0.0
    %482 = vmatmul.mubr.f32.gmra.mrb[0].mxu0 %v415
    %v483 = vpop.f32.mrb[0].mxu0
    %v484 = vadd.f32 0.0, %v483
    %v485 = vpop.f32.mrb[0].mxu0
    %486 = vdwg.mxu0
    %v487 = vmul.f32 %v484, %v139
    %488 = vrot.lane.b32.xlu0 %v39, 112
    %v489 = vpop.permute.xlu0 %488
    %490 = vrot.lane.b32.xlu0 %v40, 112
    %v491 = vpop.permute.xlu0 %490
    %492 = vrot.lane.b32.xlu0 %v41, 112
    %v493 = vpop.permute.xlu0 %492
    %494 = vrot.lane.b32.xlu0 %v42, 112
    %v495 = vpop.permute.xlu0 %494
    %496 = vrot.lane.b32.xlu0 %v43, 112
    %v497 = vpop.permute.xlu0 %496
    %498 = vrot.lane.b32.xlu0 %v44, 112
    %v499 = vpop.permute.xlu0 %498
    %500 = vrot.lane.b32.xlu0 %v45, 112
    %v501 = vpop.permute.xlu0 %500
    %502 = vrot.lane.b32.xlu0 %v46, 112
    %v503 = vpop.permute.xlu0 %502
    %v513 = vsel %vm145, %v487, 0
    %515 = vmatprep.subr.mxu0 0.0
    %516 = vmatpush1.msra.mxu0 %v489
    %517 = vmatprep.subr.mxu0 0.0
    %518 = vmatpush1.msra.mxu0 %v491
    %519 = vmatprep.subr.mxu0 0.0
    %520 = vmatpush1.msra.mxu0 %v493
    %521 = vmatprep.subr.mxu0 0.0
    %522 = vmatpush1.msra.mxu0 %v495
    %523 = vmatprep.subr.mxu0 0.0
    %524 = vmatpush1.msra.mxu0 %v497
    %525 = vmatprep.subr.mxu0 0.0
    %526 = vmatpush1.msra.mxu0 %v499
    %527 = vmatprep.subr.mxu0 0.0
    %528 = vmatpush1.msra.mxu0 %v501
    %529 = vmatprep.subr.mxu0 0.0
    %530 = vmatpush1.msra.mxu0 %v503
    %531 = vmatprep.subr.mxu0 0.0
    %532 = vmatpush1.msra.mxu0 0.0
    %533 = vmatprep.subr.mxu0 0.0
    %534 = vmatpush1.msra.mxu0 0.0
    %535 = vmatprep.subr.mxu0 0.0
    %536 = vmatpush1.msra.mxu0 0.0
    %537 = vmatprep.subr.mxu0 0.0
    %538 = vmatpush1.msra.mxu0 0.0
    %539 = vmatprep.subr.mxu0 0.0
    %540 = vmatpush1.msra.mxu0 0.0
    %541 = vmatprep.subr.mxu0 0.0
    %542 = vmatpush1.msra.mxu0 0.0
    %543 = vmatprep.subr.mxu0 0.0
    %544 = vmatpush1.msra.mxu0 0.0
    %545 = vmatprep.subr.mxu0 0.0
    %546 = vmatpush1.msra.mxu0 0.0
    %547 = vmatprep.subr.mxu0 0.0
    %548 = vmatpush1.msra.mxu0 0.0
    %549 = vmatprep.subr.mxu0 0.0
    %550 = vmatpush1.msra.mxu0 0.0
    %551 = vmatprep.subr.mxu0 0.0
    %552 = vmatpush1.msra.mxu0 0.0
    %553 = vmatprep.subr.mxu0 0.0
    %554 = vmatpush1.msra.mxu0 0.0
    %555 = vmatprep.subr.mxu0 0.0
    %556 = vmatpush1.msra.mxu0 0.0
    %557 = vmatprep.subr.mxu0 0.0
    %558 = vmatpush1.msra.mxu0 0.0
    %559 = vmatprep.subr.mxu0 0.0
    %560 = vmatpush1.msra.mxu0 0.0
    %561 = vmatprep.subr.mxu0 0.0
    %562 = vmatpush1.msra.mxu0 0.0
    %563 = vmatprep.subr.mxu0 0.0
    %564 = vmatpush1.msra.mxu0 0.0
    %565 = vmatprep.subr.mxu0 0.0
    %566 = vmatpush1.msra.mxu0 0.0
    %567 = vmatprep.subr.mxu0 0.0
    %568 = vmatpush1.msra.mxu0 0.0
    %569 = vmatprep.subr.mxu0 0.0
    %570 = vmatpush1.msra.mxu0 0.0
    %571 = vmatprep.subr.mxu0 0.0
    %572 = vmatpush1.msra.mxu0 0.0
    %573 = vmatprep.subr.mxu0 0.0
    %574 = vmatpush1.msra.mxu0 0.0
    %575 = vmatprep.subr.mxu0 0.0
    %576 = vmatpush1.msra.mxu0 0.0
    %577 = vmatprep.subr.mxu0 0.0
    %578 = vmatpush1.msra.mxu0 0.0
    %579 = vmatprep.mubr.f32.mxu0 0.0
    %580 = vmatmul.mubr.f32.gmra.mrb[0].mxu0 %v513
    %v581 = vpop.f32.mrb[0].mxu0
    %v582 = vadd.f32 0.0, %v581
    %v583 = vpop.f32.mrb[0].mxu0
    %584 = vdwg.mxu0
    %586 = vrot.lane.b32.xlu0 %v582, 8
    %v587 = vpop.permute.xlu0 %586
    %v589 = vsel %vm223, %v216, %v587
    %v590 = vlaneseq
    %v591 = vshrl.u32 %v590, 7
    %v592 = vsub.s32 0, %v591
    %v593 = vrot.slane %v48, %v592
    %594 = vrot.lane.b32.xlu0 %v39, 104
    %v595 = vpop.permute.xlu0 %594
    %596 = vrot.lane.b32.xlu0 %v40, 104
    %v597 = vpop.permute.xlu0 %596
    %601 = vrot.lane.b32.xlu0 %v593, 104
    %v602 = vpop.permute.xlu0 %601
    %v605 = vsel %vm68, %v589, 0
    %607 = vmatprep.subr.mxu0 0.0
    %608 = vmatpush1.msra.mxu0 %v595
    %609 = vmatprep.subr.mxu0 0.0
    %610 = vmatpush1.msra.mxu0 %v597
    %611 = vmatprep.subr.mxu0 0.0
    %612 = vmatpush1.msra.mxu0 0.0
    %613 = vmatprep.subr.mxu0 0.0
    %614 = vmatpush1.msra.mxu0 0.0
    %615 = vmatprep.subr.mxu0 0.0
    %616 = vmatpush1.msra.mxu0 0.0
    %617 = vmatprep.subr.mxu0 0.0
    %618 = vmatpush1.msra.mxu0 0.0
    %619 = vmatprep.subr.mxu0 0.0
    %620 = vmatpush1.msra.mxu0 0.0
    %621 = vmatprep.subr.mxu0 0.0
    %622 = vmatpush1.msra.mxu0 0.0
    %623 = vmatprep.subr.mxu0 0.0
    %624 = vmatpush1.msra.mxu0 0.0
    %625 = vmatprep.subr.mxu0 0.0
    %626 = vmatpush1.msra.mxu0 0.0
    %627 = vmatprep.subr.mxu0 0.0
    %628 = vmatpush1.msra.mxu0 0.0
    %629 = vmatprep.subr.mxu0 0.0
    %630 = vmatpush1.msra.mxu0 0.0
    %631 = vmatprep.subr.mxu0 0.0
    %632 = vmatpush1.msra.mxu0 0.0
    %633 = vmatprep.subr.mxu0 0.0
    %634 = vmatpush1.msra.mxu0 0.0
    %635 = vmatprep.subr.mxu0 0.0
    %636 = vmatpush1.msra.mxu0 0.0
    %637 = vmatprep.subr.mxu0 0.0
    %638 = vmatpush1.msra.mxu0 0.0
    %639 = vmatprep.subr.mxu0 0.0
    %640 = vmatpush1.msra.mxu0 0.0
    %641 = vmatprep.subr.mxu0 0.0
    %642 = vmatpush1.msra.mxu0 0.0
    %643 = vmatprep.subr.mxu0 0.0
    %644 = vmatpush1.msra.mxu0 0.0
    %645 = vmatprep.subr.mxu0 0.0
    %646 = vmatpush1.msra.mxu0 0.0
    %647 = vmatprep.subr.mxu0 0.0
    %648 = vmatpush1.msra.mxu0 0.0
    %649 = vmatprep.subr.mxu0 0.0
    %650 = vmatpush1.msra.mxu0 0.0
    %651 = vmatprep.subr.mxu0 0.0
    %652 = vmatpush1.msra.mxu0 0.0
    %653 = vmatprep.subr.mxu0 0.0
    %654 = vmatpush1.msra.mxu0 0.0
    %655 = vmatprep.subr.mxu0 0.0
    %656 = vmatpush1.msra.mxu0 0.0
    %657 = vmatprep.subr.mxu0 0.0
    %658 = vmatpush1.msra.mxu0 0.0
    %659 = vmatprep.subr.mxu0 0.0
    %660 = vmatpush1.msra.mxu0 0.0
    %661 = vmatprep.subr.mxu0 0.0
    %662 = vmatpush1.msra.mxu0 0.0
    %663 = vmatprep.subr.mxu0 0.0
    %664 = vmatpush1.msra.mxu0 0.0
    %665 = vmatprep.subr.mxu0 0.0
    %666 = vmatpush1.msra.mxu0 0.0
    %667 = vmatprep.subr.mxu0 0.0
    %668 = vmatpush1.msra.mxu0 0.0
    %669 = vmatprep.subr.mxu0 0.0
    %670 = vmatpush1.msra.mxu0 0.0
    %671 = vmatprep.mubr.f32.mxu0 0.0
    %672 = vmatmul.mubr.f32.gmra.mrb[0].mxu0 %v605
    %v673 = vpop.f32.mrb[0].mxu0
    %v674 = vadd.f32 %v602, %v673
    %v675 = vpop.f32.mrb[0].mxu0
    %676 = vdwg.mxu0
    %v677 = vtanh.pop %v674
    %679 = vrot.lane.b32.xlu0 %v397, 8
    %v680 = vpop.permute.xlu0 %679
    %v682 = vsel %vm223, %v677, %v680
    %v683 = vlaneseq
    %v684 = vshrl.u32 %v683, 7
    %v685 = vsub.s32 0, %v684
    %v686 = vrot.slane %v51, %v685
    %v688 = vsel %vm68, %v682, 0
    %690 = vmatprep.subr.mxu0 0.0
    %691 = vmatpush1.msra.mxu0 %v49
    %692 = vmatprep.subr.mxu0 0.0
    %693 = vmatpush1.msra.mxu0 %v50
    %694 = vmatprep.subr.mxu0 0.0
    %695 = vmatpush1.msra.mxu0 0.0
    %696 = vmatprep.subr.mxu0 0.0
    %697 = vmatpush1.msra.mxu0 0.0
    %698 = vmatprep.subr.mxu0 0.0
    %699 = vmatpush1.msra.mxu0 0.0
    %700 = vmatprep.subr.mxu0 0.0
    %701 = vmatpush1.msra.mxu0 0.0
    %702 = vmatprep.subr.mxu0 0.0
    %703 = vmatpush1.msra.mxu0 0.0
    %704 = vmatprep.subr.mxu0 0.0
    %705 = vmatpush1.msra.mxu0 0.0
    %706 = vmatprep.subr.mxu0 0.0
    %707 = vmatpush1.msra.mxu0 0.0
    %708 = vmatprep.subr.mxu0 0.0
    %709 = vmatpush1.msra.mxu0 0.0
    %710 = vmatprep.subr.mxu0 0.0
    %711 = vmatpush1.msra.mxu0 0.0
    %712 = vmatprep.subr.mxu0 0.0
    %713 = vmatpush1.msra.mxu0 0.0
    %714 = vmatprep.subr.mxu0 0.0
    %715 = vmatpush1.msra.mxu0 0.0
    %716 = vmatprep.subr.mxu0 0.0
    %717 = vmatpush1.msra.mxu0 0.0
    %718 = vmatprep.subr.mxu0 0.0
    %719 = vmatpush1.msra.mxu0 0.0
    %720 = vmatprep.subr.mxu0 0.0
    %721 = vmatpush1.msra.mxu0 0.0
    %722 = vmatprep.subr.mxu0 0.0
    %723 = vmatpush1.msra.mxu0 0.0
    %724 = vmatprep.subr.mxu0 0.0
    %725 = vmatpush1.msra.mxu0 0.0
    %726 = vmatprep.subr.mxu0 0.0
    %727 = vmatpush1.msra.mxu0 0.0
    %728 = vmatprep.subr.mxu0 0.0
    %729 = vmatpush1.msra.mxu0 0.0
    %730 = vmatprep.subr.mxu0 0.0
    %731 = vmatpush1.msra.mxu0 0.0
    %732 = vmatprep.subr.mxu0 0.0
    %733 = vmatpush1.msra.mxu0 0.0
    %734 = vmatprep.subr.mxu0 0.0
    %735 = vmatpush1.msra.mxu0 0.0
    %736 = vmatprep.subr.mxu0 0.0
    %737 = vmatpush1.msra.mxu0 0.0
    %738 = vmatprep.subr.mxu0 0.0
    %739 = vmatpush1.msra.mxu0 0.0
    %740 = vmatprep.subr.mxu0 0.0
    %741 = vmatpush1.msra.mxu0 0.0
    %742 = vmatprep.subr.mxu0 0.0
    %743 = vmatpush1.msra.mxu0 0.0
    %744 = vmatprep.subr.mxu0 0.0
    %745 = vmatpush1.msra.mxu0 0.0
    %746 = vmatprep.subr.mxu0 0.0
    %747 = vmatpush1.msra.mxu0 0.0
    %748 = vmatprep.subr.mxu0 0.0
    %749 = vmatpush1.msra.mxu0 0.0
    %750 = vmatprep.subr.mxu0 0.0
    %751 = vmatpush1.msra.mxu0 0.0
    %752 = vmatprep.subr.mxu0 0.0
    %753 = vmatpush1.msra.mxu0 0.0
    %754 = vmatprep.mubr.f32.mxu0 0.0
    %755 = vmatmul.mubr.f32.gmra.mrb[0].mxu0 %v688
    %v756 = vpop.f32.mrb[0].mxu0
    %v757 = vadd.f32 %v686, %v756
    %v758 = vpop.f32.mrb[0].mxu0
    %759 = vdwg.mxu0
    %760 = vst [vmem:[#allocation7] sm:$0xff] %v757
    // Predicated region
    $region18: #{tpu_custom_call.1} parent=1 // pred_check
      _
    $region19: #{tpu_custom_call.1} parent=1 // pred_check_branch
      %762 = sbr.rel (0) target = $region21
    $region20: #{tpu_custom_call.1} parent=1 // pred_region
      %s764 = ssub.s32 128, 128
      %765 = vsyncadd [#allocation4], %s764
      %s767 = sshll.u32 [#allocation7], 4
      %s768 = int_to_ptr.vmem [resolvable:$true] %s767
      %770 = dma.vmem_to_hbm [thread:$0]  %s768, 128, %s2, [#allocation4]
    $region21: #{tpu_custom_call.1} parent=1 // pred_fallthru
      _
    // Predicated region
    $region22: #{tpu_custom_call.1} parent=1 // pred_check
      _
    $region23: #{tpu_custom_call.1} parent=1 // pred_check_branch
      %772 = sbr.rel (0) target = $region25
    $region24: #{tpu_custom_call.1} parent=1 // pred_region
      %773 = dma.done [#allocation4], 128
    $region25: #{tpu_custom_call.1} parent=1 // pred_fallthru
      _
    %774 = vsyncpa [#allocation3], 1
    %775 = vsyncpa [#allocation6], 1
    %776 = vsyncpa [#allocation4], 1

</llo_original>
